<compile_context>
chip_gen: v7x
topology: tpu7x:2x2x1
jax: 0.10.0
libtpu: 0.0.40
codegen_flags: <defaults>
</compile_context>

<pallas_src>
import jax
import jax.numpy as jnp
from jax import lax
from jax.experimental import pallas as pl
from jax.experimental.pallas import tpu as pltpu

BN_EPS = 1e-5  # nn.BatchNorm2d default


def _make_main_kernel(num_img, hw, eps=BN_EPS):
    p_total = num_img * hw
    inv_p = 1.0 / p_total
    inv_hw = 1.0 / hw

    def kernel(x_ref, w6_ref, wcat_ref, wl_ref, pc_ref, pcat_ref, bl_ref,
               z_ref, probs_ref, s1_ref, q1_ref, s2_ref, q2_ref):
        ph = pl.program_id(0)   # 0: bn1 stats, 1: bn2/bn3 stats, 2: outputs
        im = pl.program_id(1)   # image index

        # conv6 (1x1, no bias) == per-pixel matmul
        y1 = jnp.dot(x_ref[...], w6_ref[...],
                     preferred_element_type=jnp.float32)          # (HW, C)

        # ---- pass 0: accumulate bn1 batch statistics --------------------
        @pl.when((ph == 0) & (im == 0))
        def _():
            s1_ref[...] = jnp.zeros_like(s1_ref)
            q1_ref[...] = jnp.zeros_like(q1_ref)

        @pl.when(ph == 0)
        def _():
            s1_ref[...] += jnp.sum(y1, axis=0, keepdims=True)
            q1_ref[...] += jnp.sum(y1 * y1, axis=0, keepdims=True)

        def second_stage():
            # bn1 (training-mode batch stats, biased var) + relu, then the
            # fused [convA ch0 | conv7] matmul.  (.detach() in the reference
            # only affects grads; forward values are identical.)
            mu1 = s1_ref[...] * inv_p
            var1 = jnp.maximum(q1_ref[...] * inv_p - mu1 * mu1, 0.0)
            k1 = pc_ref[0:1, :] * lax.rsqrt(var1 + eps)
            b1 = pc_ref[1:2, :] - mu1 * k1
            h = jnp.maximum(y1 * k1 + b1, 0.0)                    # (HW, C)
            return jnp.dot(h, wcat_ref[...],
                           preferred_element_type=jnp.float32)    # (HW, 1+Cout)

        # ---- pass 1: accumulate bn3(ch0)+bn2 batch statistics -----------
        @pl.when((ph == 1) & (im == 0))
        def _():
            s2_ref[...] = jnp.zeros_like(s2_ref)
            q2_ref[...] = jnp.zeros_like(q2_ref)

        @pl.when(ph == 1)
        def _():
            cmat = second_stage()
            s2_ref[...] += jnp.sum(cmat, axis=0, keepdims=True)
            q2_ref[...] += jnp.sum(cmat * cmat, axis=0, keepdims=True)

        # ---- pass 2: normalize and write outputs ------------------------
        @pl.when(ph == 2)
        def _():
            cmat = second_stage()                                 # (HW, 1+Cout)
            mu2 = s2_ref[...] * inv_p
            var2 = jnp.maximum(q2_ref[...] * inv_p - mu2 * mu2, 0.0)
            k2 = pcat_ref[0:1, :] * lax.rsqrt(var2 + eps)         # [bn3_s0|bn2_s]
            b2 = pcat_ref[1:2, :] - mu2 * k2                      # [bn3_b0|bn2_b]
            cn = cmat * k2 + b2                                   # col0: bn3, rest: bn2

            # pre-sigmoid mask logit (sigmoid/gumbel happen lane-dense later)
            z_ref[...] = cn[:, 0:1]

            # relu + adaptive_avg_pool2d((1,1)) == per-image mean over HW.
            # Column 0 is nulled by the zero first row of wl_ref (wlT_ext).
            pooled = jnp.sum(jnp.maximum(cn, 0.0), axis=0,
                             keepdims=True) * inv_hw              # (1, 1+Cout)
            logits = jnp.dot(pooled, wl_ref[...],
                             preferred_element_type=jnp.float32) + bl_ref[...]
            logits = logits - jnp.max(logits, axis=1, keepdims=True)
            ez = jnp.exp(logits)
            probs_ref[0] = ez / jnp.sum(ez, axis=1, keepdims=True)

    return kernel


def _make_blockmask_kernel(h, w, block):
    # TODO(synk): even block sizes (PyTorch trims the last row/col) not handled;
    #             the module default block=3 (odd) is implemented.
    pad = block // 2

    def kernel(gamma_ref, z_ref, u0_ref, u1_ref, o_ref, pad_ref):
        gamma = gamma_ref[...]                                    # (1, 1)
        z = z_ref[...]                                            # (H, W)
        p0 = jax.nn.sigmoid(z) * gamma                            # drop prob per pixel
        p1 = 1.0 - p0
        # sample_gumbel with eps = 1e-10 (forwarded by gumbel_softmax)
        g0 = -jnp.log(-jnp.log(u0_ref[...] + 1e-10) + 1e-10)
        g1 = -jnp.log(-jnp.log(u1_ref[...] + 1e-10) + 1e-10)
        # gumbel_softmax(log(p+1e-10), tau, hard=True): the forward value is the
        # hard argmax (tau > 0 never changes the argmax; ties -> class 0, like
        # torch.max).  The soft path is dead compute in a forward-only kernel.
        mask = jnp.where(jnp.log(p0 + 1e-10) + g0 >= jnp.log(p1 + 1e-10) + g1,
                         1.0, 0.0)

        # F.max_pool2d(kernel=block, stride=1, padding=block//2) via a zero-
        # padded VMEM scratch and statically shifted window loads (zero padding
        # == -inf padding for a {0,1} mask), then 1 - maxpool.
        pad_ref[...] = jnp.zeros_like(pad_ref)
        pad_ref[pl.ds(pad, h), pl.ds(pad, w)] = mask
        acc = pad_ref[pl.ds(0, h), pl.ds(0, w)]
        for a in range(block):
            for b in range(block):
                if a == 0 and b == 0:
                    continue
                acc = jnp.maximum(acc, pad_ref[pl.ds(a, h), pl.ds(b, w)])
        o_ref[...] = 1.0 - acc

    return kernel


def cam_dropblock_forward(x, params, drop_prob, key, *, tau=0.01, block=3):
    """x: (N, C, H, W) float32 (PyTorch NCHW).  Returns (block_mask, probs)."""
    del tau  # tau > 0 never changes the hard (forward) gumbel argmax.
    N, C, H, W = x.shape
    Cout = params["w7"].shape[0]
    HW = H * W
    P = N * HW
    assert H % 8 == 0 and HW % 8 == 0, "spatial dims must be sublane(8)-aligned"
    assert block % 2 == 1, "only odd block sizes are implemented"
    pad = block // 2
    f32 = jnp.float32

    # pixels-major / channels-last slab for the 1x1-conv matmuls (layout glue)
    xp = jnp.transpose(x, (0, 2, 3, 1)).reshape(P, C).astype(f32)

    # convA channel 1 is unused by the forward pass -> drop it and fuse the
    # remaining column with conv7 into one (C, 1+Cout) operand.
    wcat = jnp.concatenate([params["wA"].T[:, 0:1], params["w7"].T],
                           axis=1).astype(f32)
    # linear weight with a zero row prepended (nulls the pooled convA column)
    wlT_ext = jnp.concatenate([jnp.zeros((1, Cout), f32),
                               params["wl"].T.astype(f32)], axis=0)
    # packed tiny per-channel parameters (few DMAs instead of ~10)
    p_c = jnp.stack([params["bn1_s"], params["bn1_b"]]).astype(f32)      # (2, C)
    p_cat = jnp.stack([
        jnp.concatenate([params["bn3_s"][0:1], params["bn2_s"]]),
        jnp.concatenate([params["bn3_b"][0:1], params["bn2_b"]]),
    ]).astype(f32)                                                       # (2, 1+Cout)
    bl = params["bl"].reshape(1, Cout).astype(f32)

    def full(shape):
        return pl.BlockSpec(shape, lambda p, n: (0,) * len(shape))

    z_col, probs3 = pl.pallas_call(
        _make_main_kernel(N, HW),
        out_shape=(jax.ShapeDtypeStruct((P, 1), f32),
                   jax.ShapeDtypeStruct((N, 1, Cout), f32)),
        grid_spec=pltpu.PrefetchScalarGridSpec(
            num_scalar_prefetch=0,
            grid=(3, N),                       # (pass, image)
            in_specs=[
                pl.BlockSpec((HW, C), lambda p, n: (n, 0)),   # xp, per image
                full((C, C)),                                 # conv6 weight^T
                full((C, 1 + Cout)),                          # fused convA0|conv7
                full((1 + Cout, Cout)),                       # linear weight^T (+zero row)
                full((2, C)),                                 # bn1 scale/bias
                full((2, 1 + Cout)),                          # bn3(ch0)+bn2 scale/bias
                full((1, Cout)),                              # linear bias
            ],
            out_specs=(pl.BlockSpec((HW, 1), lambda p, n: (n, 0)),
                       pl.BlockSpec((1, 1, Cout), lambda p, n: (n, 0, 0))),
            scratch_shapes=[pltpu.VMEM((1, C), f32),          # sum   conv6
                            pltpu.VMEM((1, C), f32),          # sumsq conv6
                            pltpu.VMEM((1, 1 + Cout), f32),   # sum   [a0|conv7]
                            pltpu.VMEM((1, 1 + Cout), f32)]), # sumsq [a0|conv7]
        compiler_params=pltpu.CompilerParams(
            dimension_semantics=("arbitrary", "arbitrary"),   # shared stat scratch
            vmem_limit_bytes=64 * 1024 * 1024),
    )(xp, params["w6"].T.astype(f32), wcat, wlT_ext, p_c, p_cat, bl)

    # layout glue: (P, 1) and (N*H, W) are the same row-major buffer
    z2d = z_col.reshape(N * H, W)
    gamma = jnp.full((1, 1), drop_prob / (block ** 2), f32)
    u = jax.random.uniform(key, (2, N * H, W), f32)   # torch.rand analog

    bm_rows = pl.pallas_call(
        _make_blockmask_kernel(H, W, block),
        out_shape=jax.ShapeDtypeStruct((N * H, W), f32),
        grid_spec=pltpu.PrefetchScalarGridSpec(
            num_scalar_prefetch=0,
            grid=(N,),                         # one image per step
            in_specs=[
                pl.BlockSpec((1, 1), lambda n: (0, 0)),       # gamma
                pl.BlockSpec((H, W), lambda n: (n, 0)),       # z rows
                pl.BlockSpec((H, W), lambda n: (n, 0)),       # uniforms class 0
                pl.BlockSpec((H, W), lambda n: (n, 0)),       # uniforms class 1
            ],
            out_specs=pl.BlockSpec((H, W), lambda n: (n, 0)),
            scratch_shapes=[pltpu.VMEM((H + 2 * pad, W + 2 * pad), f32)]),
        compiler_params=pltpu.CompilerParams(
            dimension_semantics=("parallel",)),
    )(gamma, z2d, u[0], u[1])

    return bm_rows.reshape(N, H, W), probs3.reshape(N, Cout)


def init_params(key, inchannel, outchannel):
    # Deterministic synthetic parameters (shapes from CAM_DROPBLOCK.__init__).
    ks = jax.random.split(key, 5)

    def conv_w(k, o, i):
        return jax.random.normal(k, (o, i), jnp.float32) / jnp.sqrt(jnp.float32(i))

    return dict(
        w6=conv_w(ks[0], inchannel, inchannel),      # conv6.weight[:, :, 0, 0]
        wA=conv_w(ks[1], 2, inchannel),              # convA.weight[:, :, 0, 0]
        w7=conv_w(ks[2], outchannel, inchannel),     # conv7.weight[:, :, 0, 0]
        wl=conv_w(ks[3], outchannel, outchannel),    # linear.weight
        bl=0.1 * jax.random.normal(ks[4], (outchannel,), jnp.float32),  # linear.bias
        bn1_s=jnp.ones((inchannel,), jnp.float32),
        bn1_b=jnp.zeros((inchannel,), jnp.float32),
        bn2_s=jnp.ones((outchannel,), jnp.float32),
        bn2_b=jnp.zeros((outchannel,), jnp.float32),
        bn3_s=jnp.ones((2,), jnp.float32),
        bn3_b=jnp.zeros((2,), jnp.float32),
    )


if __name__ == "__main__":
    key = jax.random.PRNGKey(0)
    kx, kp, kg = jax.random.split(key, 3)

    N, C, H, W, COUT = 2, 4, 16, 16, 8
    x = jax.random.normal(kx, (N, C, H, W), jnp.float32)
    params = init_params(kp, C, COUT)

    block_mask, probs = cam_dropblock_forward(x, params, drop_prob=0.3, key=kg)
    jax.block_until_ready((block_mask, probs))

    assert block_mask.shape == (N, H, W)
    assert probs.shape == (N, COUT)
    assert bool(jnp.all(jnp.isfinite(block_mask)))
    assert bool(jnp.all(jnp.isfinite(probs)))
    # cheap forward-pass invariants
    assert bool(jnp.all((block_mask == 0.0) | (block_mask == 1.0)))
    assert bool(jnp.all(jnp.abs(jnp.sum(probs, axis=1) - 1.0) < 1e-4))
    print("KERNEL_OK")
</pallas_src>

<mosaic_0001>
module attributes {stable_mosaic.version = 11 : i64} {
  func.func @kernel(%arg0: i32, %arg1: i32, %arg2: memref<256x4xf32, #tpu.memory_space<vmem>>, %arg3: memref<4x4xf32, #tpu.memory_space<vmem>>, %arg4: memref<4x9xf32, #tpu.memory_space<vmem>>, %arg5: memref<9x8xf32, #tpu.memory_space<vmem>>, %arg6: memref<2x4xf32, #tpu.memory_space<vmem>>, %arg7: memref<2x9xf32, #tpu.memory_space<vmem>>, %arg8: memref<1x8xf32, #tpu.memory_space<vmem>>, %arg9: memref<256x1xf32, #tpu.memory_space<vmem>>, %arg10: memref<1x1x8xf32, #tpu.memory_space<vmem>>, %arg11: memref<1x4xf32, #tpu.memory_space<vmem>>, %arg12: memref<1x4xf32, #tpu.memory_space<vmem>>, %arg13: memref<1x9xf32, #tpu.memory_space<vmem>>, %arg14: memref<1x9xf32, #tpu.memory_space<vmem>>) attributes {dimension_semantics = [#tpu.dimension_semantics<arbitrary>, #tpu.dimension_semantics<arbitrary>], iteration_bounds = array<i64: 3, 2>, scalar_prefetch = 0 : i64, scratch_operands = 4 : i64, tpu.core_type = #tpu.core_type<tc>, window_params = [{transform_indices = @transform_0, window_bounds = array<i64: 256, 4>}, {pipeline_mode = #tpu.pipeline_mode<synchronous>, transform_indices = @transform_1, window_bounds = array<i64: 4, 4>}, {pipeline_mode = #tpu.pipeline_mode<synchronous>, transform_indices = @transform_2, window_bounds = array<i64: 4, 9>}, {pipeline_mode = #tpu.pipeline_mode<synchronous>, transform_indices = @transform_3, window_bounds = array<i64: 9, 8>}, {pipeline_mode = #tpu.pipeline_mode<synchronous>, transform_indices = @transform_4, window_bounds = array<i64: 2, 4>}, {pipeline_mode = #tpu.pipeline_mode<synchronous>, transform_indices = @transform_5, window_bounds = array<i64: 2, 9>}, {pipeline_mode = #tpu.pipeline_mode<synchronous>, transform_indices = @transform_6, window_bounds = array<i64: 1, 8>}, {transform_indices = @transform_7, window_bounds = array<i64: 256, 1>}, {transform_indices = @transform_8, window_bounds = array<i64: 1, 1, 8>}]} {
    %c0 = arith.constant 0 : index
    %c0_0 = arith.constant 0 : index
    %0 = vector.load %arg2[%c0, %c0_0] : memref<256x4xf32, #tpu.memory_space<vmem>>, vector<256x4xf32>
    %c0_1 = arith.constant 0 : index
    %c0_2 = arith.constant 0 : index
    %1 = vector.load %arg3[%c0_1, %c0_2] : memref<4x4xf32, #tpu.memory_space<vmem>>, vector<4x4xf32>
    %cst = arith.constant dense<0.000000e+00> : vector<256x4xf32>
    %2 = tpu.matmul %0, %1, %cst {dimension_numbers = #tpu.dot_dimension_numbers<[1], [0], [0], [1], [0, 0, 1, 1], [], []>} : vector<256x4xf32>, vector<4x4xf32>, vector<256x4xf32> -> vector<256x4xf32>
    %c0_i32 = arith.constant 0 : i32
    %3 = arith.cmpi eq, %arg0, %c0_i32 : i32
    %c0_i32_3 = arith.constant 0 : i32
    %4 = arith.cmpi eq, %arg1, %c0_i32_3 : i32
    %5 = arith.andi %3, %4 : i1
    %6 = arith.extui %5 : i1 to i32
    %c0_i32_4 = arith.constant 0 : i32
    %7 = arith.cmpi ne, %6, %c0_i32_4 : i32
    scf.if %7 {
      %cst_12 = arith.constant 0.000000e+00 : f32
      %22 = vector.broadcast %cst_12 : f32 to vector<1x4xf32>
      %c0_13 = arith.constant 0 : index
      %c0_14 = arith.constant 0 : index
      %23 = vector.load %arg11[%c0_13, %c0_14] : memref<1x4xf32, #tpu.memory_space<vmem>>, vector<1x4xf32>
      tpu.vector_store %arg11[%c0_13, %c0_14], %22 {strides = array<i32>} : memref<1x4xf32, #tpu.memory_space<vmem>>, vector<1x4xf32>,
      %cst_15 = arith.constant 0.000000e+00 : f32
      %24 = vector.broadcast %cst_15 : f32 to vector<1x4xf32>
      %c0_16 = arith.constant 0 : index
      %c0_17 = arith.constant 0 : index
      %25 = vector.load %arg12[%c0_16, %c0_17] : memref<1x4xf32, #tpu.memory_space<vmem>>, vector<1x4xf32>
      tpu.vector_store %arg12[%c0_16, %c0_17], %24 {strides = array<i32>} : memref<1x4xf32, #tpu.memory_space<vmem>>, vector<1x4xf32>,
    } else {
    }
    %c0_i32_5 = arith.constant 0 : i32
    %8 = arith.cmpi eq, %arg0, %c0_i32_5 : i32
    %9 = arith.extui %8 : i1 to i32
    %c0_i32_6 = arith.constant 0 : i32
    %10 = arith.cmpi ne, %9, %c0_i32_6 : i32
    scf.if %10 {
      %c0_12 = arith.constant 0 : index
      %c0_13 = arith.constant 0 : index
      %22 = vector.load %arg11[%c0_12, %c0_13] : memref<1x4xf32, #tpu.memory_space<vmem>>, vector<1x4xf32>
      %cst_14 = arith.constant dense<0.000000e+00> : vector<4xf32>
      %23 = vector.multi_reduction <add>, %2, %cst_14 [0] : vector<256x4xf32> to vector<4xf32>
      %24 = vector.shape_cast %23 : vector<4xf32> to vector<1x4xf32>
      %25 = arith.addf %22, %24 : vector<1x4xf32>
      %c0_15 = arith.constant 0 : index
      %c0_16 = arith.constant 0 : index
      %26 = vector.load %arg11[%c0_15, %c0_16] : memref<1x4xf32, #tpu.memory_space<vmem>>, vector<1x4xf32>
      tpu.vector_store %arg11[%c0_15, %c0_16], %25 {strides = array<i32>} : memref<1x4xf32, #tpu.memory_space<vmem>>, vector<1x4xf32>,
      %c0_17 = arith.constant 0 : index
      %c0_18 = arith.constant 0 : index
      %27 = vector.load %arg12[%c0_17, %c0_18] : memref<1x4xf32, #tpu.memory_space<vmem>>, vector<1x4xf32>
      %28 = arith.mulf %2, %2 : vector<256x4xf32>
      %cst_19 = arith.constant dense<0.000000e+00> : vector<4xf32>
      %29 = vector.multi_reduction <add>, %28, %cst_19 [0] : vector<256x4xf32> to vector<4xf32>
      %30 = vector.shape_cast %29 : vector<4xf32> to vector<1x4xf32>
      %31 = arith.addf %27, %30 : vector<1x4xf32>
      %c0_20 = arith.constant 0 : index
      %c0_21 = arith.constant 0 : index
      %32 = vector.load %arg12[%c0_20, %c0_21] : memref<1x4xf32, #tpu.memory_space<vmem>>, vector<1x4xf32>
      tpu.vector_store %arg12[%c0_20, %c0_21], %31 {strides = array<i32>} : memref<1x4xf32, #tpu.memory_space<vmem>>, vector<1x4xf32>,
    } else {
    }
    %c1_i32 = arith.constant 1 : i32
    %11 = arith.cmpi eq, %arg0, %c1_i32 : i32
    %c0_i32_7 = arith.constant 0 : i32
    %12 = arith.cmpi eq, %arg1, %c0_i32_7 : i32
    %13 = arith.andi %11, %12 : i1
    %14 = arith.extui %13 : i1 to i32
    %c0_i32_8 = arith.constant 0 : i32
    %15 = arith.cmpi ne, %14, %c0_i32_8 : i32
    scf.if %15 {
      %cst_12 = arith.constant 0.000000e+00 : f32
      %22 = vector.broadcast %cst_12 : f32 to vector<1x9xf32>
      %c0_13 = arith.constant 0 : index
      %c0_14 = arith.constant 0 : index
      %23 = vector.load %arg13[%c0_13, %c0_14] : memref<1x9xf32, #tpu.memory_space<vmem>>, vector<1x9xf32>
      tpu.vector_store %arg13[%c0_13, %c0_14], %22 {strides = array<i32>} : memref<1x9xf32, #tpu.memory_space<vmem>>, vector<1x9xf32>,
      %cst_15 = arith.constant 0.000000e+00 : f32
      %24 = vector.broadcast %cst_15 : f32 to vector<1x9xf32>
      %c0_16 = arith.constant 0 : index
      %c0_17 = arith.constant 0 : index
      %25 = vector.load %arg14[%c0_16, %c0_17] : memref<1x9xf32, #tpu.memory_space<vmem>>, vector<1x9xf32>
      tpu.vector_store %arg14[%c0_16, %c0_17], %24 {strides = array<i32>} : memref<1x9xf32, #tpu.memory_space<vmem>>, vector<1x9xf32>,
    } else {
    }
    %c1_i32_9 = arith.constant 1 : i32
    %16 = arith.cmpi eq, %arg0, %c1_i32_9 : i32
    %17 = arith.extui %16 : i1 to i32
    %c0_i32_10 = arith.constant 0 : i32
    %18 = arith.cmpi ne, %17, %c0_i32_10 : i32
    scf.if %18 {
      %c0_12 = arith.constant 0 : index
      %c0_13 = arith.constant 0 : index
      %22 = vector.load %arg11[%c0_12, %c0_13] : memref<1x4xf32, #tpu.memory_space<vmem>>, vector<1x4xf32>
      %cst_14 = arith.constant 0.001953125 : f32
      %23 = vector.broadcast %cst_14 : f32 to vector<1x4xf32>
      %24 = arith.mulf %22, %23 : vector<1x4xf32>
      %c0_15 = arith.constant 0 : index
      %c0_16 = arith.constant 0 : index
      %25 = vector.load %arg12[%c0_15, %c0_16] : memref<1x4xf32, #tpu.memory_space<vmem>>, vector<1x4xf32>
      %cst_17 = arith.constant 0.001953125 : f32
      %26 = vector.broadcast %cst_17 : f32 to vector<1x4xf32>
      %27 = arith.mulf %25, %26 : vector<1x4xf32>
      %28 = arith.mulf %24, %24 : vector<1x4xf32>
      %29 = arith.subf %27, %28 : vector<1x4xf32>
      %cst_18 = arith.constant 0.000000e+00 : f32
      %30 = vector.broadcast %cst_18 : f32 to vector<1x4xf32>
      %31 = arith.maximumf %29, %30 : vector<1x4xf32>
      %c0_19 = arith.constant 0 : index
      %c0_20 = arith.constant 0 : index
      %32 = vector.load %arg6[%c0_19, %c0_20] : memref<2x4xf32, #tpu.memory_space<vmem>>, vector<1x4xf32>
      %cst_21 = arith.constant 9.99999974E-6 : f32
      %33 = vector.broadcast %cst_21 : f32 to vector<1x4xf32>
      %34 = arith.addf %31, %33 : vector<1x4xf32>
      %35 = math.rsqrt %34 : vector<1x4xf32>
      %36 = arith.mulf %32, %35 : vector<1x4xf32>
      %c1 = arith.constant 1 : index
      %c0_22 = arith.constant 0 : index
      %37 = vector.load %arg6[%c1, %c0_22] : memref<2x4xf32, #tpu.memory_space<vmem>>, vector<1x4xf32>
      %38 = arith.mulf %24, %36 : vector<1x4xf32>
      %39 = arith.subf %37, %38 : vector<1x4xf32>
      %40 = vector.broadcast %36 : vector<1x4xf32> to vector<256x4xf32>
      %41 = arith.mulf %2, %40 : vector<256x4xf32>
      %42 = vector.broadcast %39 : vector<1x4xf32> to vector<256x4xf32>
      %43 = arith.addf %41, %42 : vector<256x4xf32>
      %cst_23 = arith.constant 0.000000e+00 : f32
      %44 = vector.broadcast %cst_23 : f32 to vector<256x4xf32>
      %45 = arith.maximumf %43, %44 : vector<256x4xf32>
      %c0_24 = arith.constant 0 : index
      %c0_25 = arith.constant 0 : index
      %46 = vector.load %arg4[%c0_24, %c0_25] : memref<4x9xf32, #tpu.memory_space<vmem>>, vector<4x9xf32>
      %cst_26 = arith.constant dense<0.000000e+00> : vector<256x9xf32>
      %47 = tpu.matmul %45, %46, %cst_26 {dimension_numbers = #tpu.dot_dimension_numbers<[1], [0], [0], [1], [0, 0, 1, 1], [], []>} : vector<256x4xf32>, vector<4x9xf32>, vector<256x9xf32> -> vector<256x9xf32>
      %c0_27 = arith.constant 0 : index
      %c0_28 = arith.constant 0 : index
      %48 = vector.load %arg13[%c0_27, %c0_28] : memref<1x9xf32, #tpu.memory_space<vmem>>, vector<1x9xf32>
      %cst_29 = arith.constant dense<0.000000e+00> : vector<9xf32>
      %49 = vector.multi_reduction <add>, %47, %cst_29 [0] : vector<256x9xf32> to vector<9xf32>
      %50 = vector.shape_cast %49 : vector<9xf32> to vector<1x9xf32>
      %51 = arith.addf %48, %50 : vector<1x9xf32>
      %c0_30 = arith.constant 0 : index
      %c0_31 = arith.constant 0 : index
      %52 = vector.load %arg13[%c0_30, %c0_31] : memref<1x9xf32, #tpu.memory_space<vmem>>, vector<1x9xf32>
      tpu.vector_store %arg13[%c0_30, %c0_31], %51 {strides = array<i32>} : memref<1x9xf32, #tpu.memory_space<vmem>>, vector<1x9xf32>,
      %c0_32 = arith.constant 0 : index
      %c0_33 = arith.constant 0 : index
      %53 = vector.load %arg14[%c0_32, %c0_33] : memref<1x9xf32, #tpu.memory_space<vmem>>, vector<1x9xf32>
      %54 = arith.mulf %47, %47 : vector<256x9xf32>
      %cst_34 = arith.constant dense<0.000000e+00> : vector<9xf32>
      %55 = vector.multi_reduction <add>, %54, %cst_34 [0] : vector<256x9xf32> to vector<9xf32>
      %56 = vector.shape_cast %55 : vector<9xf32> to vector<1x9xf32>
      %57 = arith.addf %53, %56 : vector<1x9xf32>
      %c0_35 = arith.constant 0 : index
      %c0_36 = arith.constant 0 : index
      %58 = vector.load %arg14[%c0_35, %c0_36] : memref<1x9xf32, #tpu.memory_space<vmem>>, vector<1x9xf32>
      tpu.vector_store %arg14[%c0_35, %c0_36], %57 {strides = array<i32>} : memref<1x9xf32, #tpu.memory_space<vmem>>, vector<1x9xf32>,
    } else {
    }
    %c2_i32 = arith.constant 2 : i32
    %19 = arith.cmpi eq, %arg0, %c2_i32 : i32
    %20 = arith.extui %19 : i1 to i32
    %c0_i32_11 = arith.constant 0 : i32
    %21 = arith.cmpi ne, %20, %c0_i32_11 : i32
    scf.if %21 {
      %c0_12 = arith.constant 0 : index
      %c0_13 = arith.constant 0 : index
      %22 = vector.load %arg11[%c0_12, %c0_13] : memref<1x4xf32, #tpu.memory_space<vmem>>, vector<1x4xf32>
      %cst_14 = arith.constant 0.001953125 : f32
      %23 = vector.broadcast %cst_14 : f32 to vector<1x4xf32>
      %24 = arith.mulf %22, %23 : vector<1x4xf32>
      %c0_15 = arith.constant 0 : index
      %c0_16 = arith.constant 0 : index
      %25 = vector.load %arg12[%c0_15, %c0_16] : memref<1x4xf32, #tpu.memory_space<vmem>>, vector<1x4xf32>
      %cst_17 = arith.constant 0.001953125 : f32
      %26 = vector.broadcast %cst_17 : f32 to vector<1x4xf32>
      %27 = arith.mulf %25, %26 : vector<1x4xf32>
      %28 = arith.mulf %24, %24 : vector<1x4xf32>
      %29 = arith.subf %27, %28 : vector<1x4xf32>
      %cst_18 = arith.constant 0.000000e+00 : f32
      %30 = vector.broadcast %cst_18 : f32 to vector<1x4xf32>
      %31 = arith.maximumf %29, %30 : vector<1x4xf32>
      %c0_19 = arith.constant 0 : index
      %c0_20 = arith.constant 0 : index
      %32 = vector.load %arg6[%c0_19, %c0_20] : memref<2x4xf32, #tpu.memory_space<vmem>>, vector<1x4xf32>
      %cst_21 = arith.constant 9.99999974E-6 : f32
      %33 = vector.broadcast %cst_21 : f32 to vector<1x4xf32>
      %34 = arith.addf %31, %33 : vector<1x4xf32>
      %35 = math.rsqrt %34 : vector<1x4xf32>
      %36 = arith.mulf %32, %35 : vector<1x4xf32>
      %c1 = arith.constant 1 : index
      %c0_22 = arith.constant 0 : index
      %37 = vector.load %arg6[%c1, %c0_22] : memref<2x4xf32, #tpu.memory_space<vmem>>, vector<1x4xf32>
      %38 = arith.mulf %24, %36 : vector<1x4xf32>
      %39 = arith.subf %37, %38 : vector<1x4xf32>
      %40 = vector.broadcast %36 : vector<1x4xf32> to vector<256x4xf32>
      %41 = arith.mulf %2, %40 : vector<256x4xf32>
      %42 = vector.broadcast %39 : vector<1x4xf32> to vector<256x4xf32>
      %43 = arith.addf %41, %42 : vector<256x4xf32>
      %cst_23 = arith.constant 0.000000e+00 : f32
      %44 = vector.broadcast %cst_23 : f32 to vector<256x4xf32>
      %45 = arith.maximumf %43, %44 : vector<256x4xf32>
      %c0_24 = arith.constant 0 : index
      %c0_25 = arith.constant 0 : index
      %46 = vector.load %arg4[%c0_24, %c0_25] : memref<4x9xf32, #tpu.memory_space<vmem>>, vector<4x9xf32>
      %cst_26 = arith.constant dense<0.000000e+00> : vector<256x9xf32>
      %47 = tpu.matmul %45, %46, %cst_26 {dimension_numbers = #tpu.dot_dimension_numbers<[1], [0], [0], [1], [0, 0, 1, 1], [], []>} : vector<256x4xf32>, vector<4x9xf32>, vector<256x9xf32> -> vector<256x9xf32>
      %c0_27 = arith.constant 0 : index
      %c0_28 = arith.constant 0 : index
      %48 = vector.load %arg13[%c0_27, %c0_28] : memref<1x9xf32, #tpu.memory_space<vmem>>, vector<1x9xf32>
      %cst_29 = arith.constant 0.001953125 : f32
      %49 = vector.broadcast %cst_29 : f32 to vector<1x9xf32>
      %50 = arith.mulf %48, %49 : vector<1x9xf32>
      %c0_30 = arith.constant 0 : index
      %c0_31 = arith.constant 0 : index
      %51 = vector.load %arg14[%c0_30, %c0_31] : memref<1x9xf32, #tpu.memory_space<vmem>>, vector<1x9xf32>
      %cst_32 = arith.constant 0.001953125 : f32
      %52 = vector.broadcast %cst_32 : f32 to vector<1x9xf32>
      %53 = arith.mulf %51, %52 : vector<1x9xf32>
      %54 = arith.mulf %50, %50 : vector<1x9xf32>
      %55 = arith.subf %53, %54 : vector<1x9xf32>
      %cst_33 = arith.constant 0.000000e+00 : f32
      %56 = vector.broadcast %cst_33 : f32 to vector<1x9xf32>
      %57 = arith.maximumf %55, %56 : vector<1x9xf32>
      %c0_34 = arith.constant 0 : index
      %c0_35 = arith.constant 0 : index
      %58 = vector.load %arg7[%c0_34, %c0_35] : memref<2x9xf32, #tpu.memory_space<vmem>>, vector<1x9xf32>
      %cst_36 = arith.constant 9.99999974E-6 : f32
      %59 = vector.broadcast %cst_36 : f32 to vector<1x9xf32>
      %60 = arith.addf %57, %59 : vector<1x9xf32>
      %61 = math.rsqrt %60 : vector<1x9xf32>
      %62 = arith.mulf %58, %61 : vector<1x9xf32>
      %c1_37 = arith.constant 1 : index
      %c0_38 = arith.constant 0 : index
      %63 = vector.load %arg7[%c1_37, %c0_38] : memref<2x9xf32, #tpu.memory_space<vmem>>, vector<1x9xf32>
      %64 = arith.mulf %50, %62 : vector<1x9xf32>
      %65 = arith.subf %63, %64 : vector<1x9xf32>
      %66 = vector.broadcast %62 : vector<1x9xf32> to vector<256x9xf32>
      %67 = arith.mulf %47, %66 : vector<256x9xf32>
      %68 = vector.broadcast %65 : vector<1x9xf32> to vector<256x9xf32>
      %69 = arith.addf %67, %68 : vector<256x9xf32>
      %70 = vector.extract_strided_slice %69 {offsets = [0, 0], sizes = [256, 1], strides = [1, 1]} : vector<256x9xf32> to vector<256x1xf32>
      %c0_39 = arith.constant 0 : index
      %c0_40 = arith.constant 0 : index
      %71 = vector.load %arg9[%c0_39, %c0_40] : memref<256x1xf32, #tpu.memory_space<vmem>>, vector<256x1xf32>
      tpu.vector_store %arg9[%c0_39, %c0_40], %70 {strides = array<i32>} : memref<256x1xf32, #tpu.memory_space<vmem>>, vector<256x1xf32>,
      %cst_41 = arith.constant 0.000000e+00 : f32
      %72 = vector.broadcast %cst_41 : f32 to vector<256x9xf32>
      %73 = arith.maximumf %69, %72 : vector<256x9xf32>
      %cst_42 = arith.constant dense<0.000000e+00> : vector<9xf32>
      %74 = vector.multi_reduction <add>, %73, %cst_42 [0] : vector<256x9xf32> to vector<9xf32>
      %75 = vector.shape_cast %74 : vector<9xf32> to vector<1x9xf32>
      %cst_43 = arith.constant 3.906250e-03 : f32
      %76 = vector.broadcast %cst_43 : f32 to vector<1x9xf32>
      %77 = arith.mulf %75, %76 : vector<1x9xf32>
      %c0_44 = arith.constant 0 : index
      %c0_45 = arith.constant 0 : index
      %78 = vector.load %arg5[%c0_44, %c0_45] : memref<9x8xf32, #tpu.memory_space<vmem>>, vector<9x8xf32>
      %cst_46 = arith.constant dense<0.000000e+00> : vector<1x8xf32>
      %79 = tpu.matmul %77, %78, %cst_46 {dimension_numbers = #tpu.dot_dimension_numbers<[1], [0], [0], [1], [0, 0, 1, 1], [], []>} : vector<1x9xf32>, vector<9x8xf32>, vector<1x8xf32> -> vector<1x8xf32>
      %c0_47 = arith.constant 0 : index
      %c0_48 = arith.constant 0 : index
      %80 = vector.load %arg8[%c0_47, %c0_48] : memref<1x8xf32, #tpu.memory_space<vmem>>, vector<1x8xf32>
      %81 = arith.addf %79, %80 : vector<1x8xf32>
      %cst_49 = arith.constant dense<0xFF800000> : vector<1xf32>
      %82 = vector.multi_reduction <maximumf>, %81, %cst_49 [1] : vector<1x8xf32> to vector<1xf32>
      %83 = vector.shape_cast %82 : vector<1xf32> to vector<1x1xf32>
      %84 = vector.broadcast %83 : vector<1x1xf32> to vector<1x8xf32>
      %85 = arith.subf %81, %84 : vector<1x8xf32>
      %86 = math.exp %85 : vector<1x8xf32>
      %cst_50 = arith.constant dense<0.000000e+00> : vector<1xf32>
      %87 = vector.multi_reduction <add>, %86, %cst_50 [1] : vector<1x8xf32> to vector<1xf32>
      %88 = vector.shape_cast %87 : vector<1xf32> to vector<1x1xf32>
      %89 = vector.broadcast %88 : vector<1x1xf32> to vector<1x8xf32>
      %90 = arith.divf %86, %89 : vector<1x8xf32>
      %c0_51 = arith.constant 0 : index
      %c0_52 = arith.constant 0 : index
      %c0_53 = arith.constant 0 : index
      %91 = vector.load %arg10[%c0_51, %c0_52, %c0_53] : memref<1x1x8xf32, #tpu.memory_space<vmem>>, vector<1x1x8xf32>
      %92 = vector.shape_cast %91 : vector<1x1x8xf32> to vector<1x8xf32>
      %93 = vector.shape_cast %90 : vector<1x8xf32> to vector<1x1x8xf32>
      tpu.vector_store %arg10[%c0_51, %c0_52, %c0_53], %93 {strides = array<i32>} : memref<1x1x8xf32, #tpu.memory_space<vmem>>, vector<1x1x8xf32>,
    } else {
    }
    return
  }
  func.func @transform_0(%arg0: i32, %arg1: i32) -> (i32, i32) {
    %c0_i32 = arith.constant 0 : i32
    %c0_i32_0 = arith.constant 0 : i32
    return %arg1, %c0_i32 : i32, i32
  }
  func.func @transform_1(%arg0: i32, %arg1: i32) -> (i32, i32) {
    %c0_i32 = arith.constant 0 : i32
    %c0_i32_0 = arith.constant 0 : i32
    %c0_i32_1 = arith.constant 0 : i32
    return %c0_i32, %c0_i32_0 : i32, i32
  }
  func.func @transform_2(%arg0: i32, %arg1: i32) -> (i32, i32) {
    %c0_i32 = arith.constant 0 : i32
    %c0_i32_0 = arith.constant 0 : i32
    %c0_i32_1 = arith.constant 0 : i32
    return %c0_i32, %c0_i32_0 : i32, i32
  }
  func.func @transform_3(%arg0: i32, %arg1: i32) -> (i32, i32) {
    %c0_i32 = arith.constant 0 : i32
    %c0_i32_0 = arith.constant 0 : i32
    %c0_i32_1 = arith.constant 0 : i32
    return %c0_i32, %c0_i32_0 : i32, i32
  }
  func.func @transform_4(%arg0: i32, %arg1: i32) -> (i32, i32) {
    %c0_i32 = arith.constant 0 : i32
    %c0_i32_0 = arith.constant 0 : i32
    %c0_i32_1 = arith.constant 0 : i32
    return %c0_i32, %c0_i32_0 : i32, i32
  }
  func.func @transform_5(%arg0: i32, %arg1: i32) -> (i32, i32) {
    %c0_i32 = arith.constant 0 : i32
    %c0_i32_0 = arith.constant 0 : i32
    %c0_i32_1 = arith.constant 0 : i32
    return %c0_i32, %c0_i32_0 : i32, i32
  }
  func.func @transform_6(%arg0: i32, %arg1: i32) -> (i32, i32) {
    %c0_i32 = arith.constant 0 : i32
    %c0_i32_0 = arith.constant 0 : i32
    %c0_i32_1 = arith.constant 0 : i32
    return %c0_i32, %c0_i32_0 : i32, i32
  }
  func.func @transform_7(%arg0: i32, %arg1: i32) -> (i32, i32) {
    %c0_i32 = arith.constant 0 : i32
    %c0_i32_0 = arith.constant 0 : i32
    return %arg1, %c0_i32 : i32, i32
  }
  func.func @transform_8(%arg0: i32, %arg1: i32) -> (i32, i32, i32) {
    %c0_i32 = arith.constant 0 : i32
    %c0_i32_0 = arith.constant 0 : i32
    %c0_i32_1 = arith.constant 0 : i32
    return %arg1, %c0_i32, %c0_i32_0 : i32, i32, i32
  }
}

</mosaic_0001>

<llo_original>
// kernel: tpu_custom_call.1
$region0: #{tpu_custom_call.1}
  #allocation0 [shape = 'u32[]', space=smem, size = 0x4, offset = 0x4, fixed_abs, tag = 'smem constant byte address 0x4 - core index']
  #allocation1 [shape = 'u32[144,128]{1,0:T(1,128)}', space=vmem, size = 0x12000, scoped, tag = 'internal scratch']
  #allocation2 [shape = 'f32[1,4]{1,0:T(1,128)}', space=vmem, size = 0x200, scoped, tag = 'scratch operand']
  #allocation3 [shape = 'f32[1,4]{1,0:T(1,128)}', space=vmem, size = 0x200, scoped, tag = 'scratch operand']
  #allocation4 [shape = 'f32[1,9]{1,0:T(1,128)}', space=vmem, size = 0x200, scoped, tag = 'scratch operand']
  #allocation5 [shape = 'f32[1,9]{1,0:T(1,128)}', space=vmem, size = 0x200, scoped, tag = 'scratch operand']
  %s0 = inlined_call_operand.hbm [shape: f32[512,4], index: 0, kind: input, shape index: {}]
  %s1 = inlined_call_operand.hbm [shape: f32[4,4], index: 1, kind: input, shape index: {}]
  %s2 = inlined_call_operand.hbm [shape: f32[4,9], index: 2, kind: input, shape index: {}]
  %s3 = inlined_call_operand.hbm [shape: f32[9,8], index: 3, kind: input, shape index: {}]
  %s4 = inlined_call_operand.hbm [shape: f32[2,4], index: 4, kind: input, shape index: {}]
  %s5 = inlined_call_operand.hbm [shape: f32[2,9], index: 5, kind: input, shape index: {}]
  %s6 = inlined_call_operand.hbm [shape: f32[1,8], index: 6, kind: input, shape index: {}]
  %s7 = inlined_call_operand.hbm [shape: f32[512,1], index: 7, kind: output, shape index: {0}]
  %s8 = inlined_call_operand.hbm [shape: f32[2,1,8], index: 8, kind: output, shape index: {1}]
  %9 = xla_tuple %s7, %s8
  %s10 = sld [smem:[#allocation0]]
  $region117: #{tpu_custom_call.1} parent=0
    _
  %s12 = ssub.s32 1, %s10
  %s13 = scalar_select 0, %s12, %s10
  $region1: #{tpu_custom_call.1} parent=0
    #allocation6 [shape = 'u8[262144]{0}', space=vmem, size = 0x40000, scoped, tag = 'input window, operand 0']
    #allocation7 [shape = 's32[2]{0}', space=sflag, size = 0x8, scoped, tag = 'scoped memory for tpu_custom_call.1']
    #allocation8 [shape = 's32[2]{0}', space=sflag, size = 0x8, scoped, tag = 'scoped memory for tpu_custom_call.1']
    #allocation9 [shape = 'u8[2048]{0}', space=vmem, size = 0x800, scoped, tag = 'input window, operand 1, single buffered']
    #allocation10 [shape = 's32[1]{0}', space=sflag, size = 0x4, scoped, tag = 'scoped memory for tpu_custom_call.1']
    #allocation11 [shape = 'u8[2048]{0}', space=vmem, size = 0x800, scoped, tag = 'input window, operand 2, single buffered']
    #allocation12 [shape = 'u8[8192]{0}', space=vmem, size = 0x2000, scoped, tag = 'input window, operand 3, single buffered']
    #allocation13 [shape = 's32[1]{0}', space=sflag, size = 0x4, scoped, tag = 'scoped memory for tpu_custom_call.1']
    #allocation14 [shape = 'u8[1024]{0}', space=vmem, size = 0x400, scoped, tag = 'input window, operand 4, single buffered']
    #allocation15 [shape = 'u8[1024]{0}', space=vmem, size = 0x400, scoped, tag = 'input window, operand 5, single buffered']
    #allocation16 [shape = 's32[1]{0}', space=sflag, size = 0x4, scoped, tag = 'scoped memory for tpu_custom_call.1']
    #allocation17 [shape = 'u8[512]{0}', space=vmem, size = 0x400, scoped, tag = 'input window, operand 6, single buffered']
    #allocation18 [shape = 'u8[262144]{0}', space=vmem, size = 0x40000, scoped, tag = 'output window, operand 0']
    #allocation19 [shape = 'u8[1024]{0}', space=vmem, size = 0x400, scoped, tag = 'output window, operand 1']
    #allocation20 [shape = 's32[2]{0}', space=sflag, size = 0x8, scoped, tag = 'scoped memory for tpu_custom_call.1']
    %14 = vsyncpa [#allocation7], 0
    %s15 = scalar_lea.sflag [#allocation7], 1
    %16 = vsyncpa %s15, 0
    %17 = vsyncpa [#allocation10], 0
    %18 = vsyncpa [#allocation13], 0
    %19 = vsyncpa [#allocation16], 0
    %20 = vsyncpa [#allocation8], 0
    %s21 = scalar_lea.sflag [#allocation8], 1
    %22 = vsyncpa %s21, 0
    %23 = vsyncpa [#allocation20], 0
    %s24 = scalar_lea.sflag [#allocation20], 1
    %25 = vsyncpa %s24, 0
    loop: start=0, step=1, limit=8
    $region2: #{tpu_custom_call.1} parent=1 // loop_pre_header
      _
    $region3: #{tpu_custom_call.1} parent=1 // loop_header
      %s27 = sphi 0, %s31
      %p28 = scmp.ge.s32.totalorder %s27, 8
      %s34 = sphi 0, %s46
      %s35 = sphi 0, %s42
      %s36 = sphi 0, %s34
      %s37 = sphi 0, %s35
      %s38 = sphi 0, %s36
      %s39 = sphi 0, %s37
      %s49 = sphi 0, %s51
      %s52 = sphi 0, %s49
      %s53 = sphi 0, %s52
      %s69 = sphi 0, %s53
      %s73 = sphi 0, %s73
      %s75 = sphi 0, %s73
      %s76 = sphi 0, %s75
      %s90 = sphi 0, %s76
      %s94 = sphi 0, %s94
      %s96 = sphi 0, %s94
      %s97 = sphi 0, %s96
      %s111 = sphi 0, %s97
      %s115 = sphi 0, %s115
      %s117 = sphi 0, %s115
      %s118 = sphi 0, %s117
      %s132 = sphi 0, %s118
      %s136 = sphi 0, %s136
      %s138 = sphi 0, %s136
      %s139 = sphi 0, %s138
      %s153 = sphi 0, %s139
      %s157 = sphi 0, %s157
      %s159 = sphi 0, %s157
      %s160 = sphi 0, %s159
      %s174 = sphi 0, %s160
      %s178 = sphi 0, %s178
      %s180 = sphi 0, %s178
      %s181 = sphi 0, %s180
      %s195 = sphi 0, %s181
      %s201 = sphi 0, %s203
      %s204 = sphi 0, %s201
      %s205 = sphi 0, %s204
      %s221 = sphi 0, %s205
      %s227 = sphi 0, %s229
      %s230 = sphi 0, %s227
      %s231 = sphi 0, %s230
      %s247 = sphi 0, %s231
    $region4: #{tpu_custom_call.1} parent=1 // loop_header_branch
      %30 = sbr.rel (%p28) target = $region8
    $region5: #{tpu_custom_call.1} parent=1 // loop_body
      %s32 = ssub.s32 %s27, 1
      %s33 = ssub.s32 %s27, 2
      %s40 = sadd.s32 1, %s35
      %p41 = scmp.ge.s32.totalorder %s40, 2
      %s42 = scalar_select %p41, 0, %s40
      %s43 = sadd.s32 1, %s34
      %s44 = scalar_select %p41, %s43, %s34
      %p45 = scmp.ge.s32.totalorder %s44, 3
      %s46 = scalar_select %p45, 0, %s44
      %s47 = ssub.s32 %s35, %s42
      %p48 = scmp.eq.s32.totalorder %s47, 0
      %s50 = sadd.s32 %s49, 1
      %s51 = scalar_select %p48, %s49, %s50
      %p54 = pneg %p48
      %p55 = scmp.eq.s32.totalorder %s27, 5
      %p56 = por %p54, %p55
      %p57 = scmp.ne.s32.totalorder %s49, %s52
      %p58 = scmp.eq.s32.totalorder %s27, 0
      %p59 = por %p57, %p58
      %p60 = scmp.ne.s32.totalorder %s49, %s52
      %p61 = scmp.eq.s32.totalorder %s32, 5
      %p62 = por %p60, %p61
      %p63 = scmp.ne.s32.totalorder %s52, %s53
      %p64 = scmp.eq.s32.totalorder %s32, 0
      %p65 = por %p63, %p64
      %p66 = scmp.ne.s32.totalorder %s52, %s53
      %p67 = scmp.eq.s32.totalorder %s33, 5
      %p68 = por %p66, %p67
      %p70 = scmp.ne.s32.totalorder %s53, %s69
      %p71 = scmp.eq.s32.totalorder %s33, 0
      %p72 = por %p70, %p71
      %s74 = sadd.s32 %s73, 1
      %p77 = scmp.eq.s32.totalorder %s27, 5
      %p78 = scmp.ne.s32.totalorder %s73, %s75
      %p79 = scmp.eq.s32.totalorder %s27, 0
      %p80 = por %p78, %p79
      %p81 = scmp.ne.s32.totalorder %s73, %s75
      %p82 = scmp.eq.s32.totalorder %s32, 5
      %p83 = por %p81, %p82
      %p84 = scmp.ne.s32.totalorder %s75, %s76
      %p85 = scmp.eq.s32.totalorder %s32, 0
      %p86 = por %p84, %p85
      %p87 = scmp.ne.s32.totalorder %s75, %s76
      %p88 = scmp.eq.s32.totalorder %s33, 5
      %p89 = por %p87, %p88
      %p91 = scmp.ne.s32.totalorder %s76, %s90
      %p92 = scmp.eq.s32.totalorder %s33, 0
      %p93 = por %p91, %p92
      %s95 = sadd.s32 %s94, 1
      %p98 = scmp.eq.s32.totalorder %s27, 5
      %p99 = scmp.ne.s32.totalorder %s94, %s96
      %p100 = scmp.eq.s32.totalorder %s27, 0
      %p101 = por %p99, %p100
      %p102 = scmp.ne.s32.totalorder %s94, %s96
      %p103 = scmp.eq.s32.totalorder %s32, 5
      %p104 = por %p102, %p103
      %p105 = scmp.ne.s32.totalorder %s96, %s97
      %p106 = scmp.eq.s32.totalorder %s32, 0
      %p107 = por %p105, %p106
      %p108 = scmp.ne.s32.totalorder %s96, %s97
      %p109 = scmp.eq.s32.totalorder %s33, 5
      %p110 = por %p108, %p109
      %p112 = scmp.ne.s32.totalorder %s97, %s111
      %p113 = scmp.eq.s32.totalorder %s33, 0
      %p114 = por %p112, %p113
      %s116 = sadd.s32 %s115, 1
      %p119 = scmp.eq.s32.totalorder %s27, 5
      %p120 = scmp.ne.s32.totalorder %s115, %s117
      %p121 = scmp.eq.s32.totalorder %s27, 0
      %p122 = por %p120, %p121
      %p123 = scmp.ne.s32.totalorder %s115, %s117
      %p124 = scmp.eq.s32.totalorder %s32, 5
      %p125 = por %p123, %p124
      %p126 = scmp.ne.s32.totalorder %s117, %s118
      %p127 = scmp.eq.s32.totalorder %s32, 0
      %p128 = por %p126, %p127
      %p129 = scmp.ne.s32.totalorder %s117, %s118
      %p130 = scmp.eq.s32.totalorder %s33, 5
      %p131 = por %p129, %p130
      %p133 = scmp.ne.s32.totalorder %s118, %s132
      %p134 = scmp.eq.s32.totalorder %s33, 0
      %p135 = por %p133, %p134
      %s137 = sadd.s32 %s136, 1
      %p140 = scmp.eq.s32.totalorder %s27, 5
      %p141 = scmp.ne.s32.totalorder %s136, %s138
      %p142 = scmp.eq.s32.totalorder %s27, 0
      %p143 = por %p141, %p142
      %p144 = scmp.ne.s32.totalorder %s136, %s138
      %p145 = scmp.eq.s32.totalorder %s32, 5
      %p146 = por %p144, %p145
      %p147 = scmp.ne.s32.totalorder %s138, %s139
      %p148 = scmp.eq.s32.totalorder %s32, 0
      %p149 = por %p147, %p148
      %p150 = scmp.ne.s32.totalorder %s138, %s139
      %p151 = scmp.eq.s32.totalorder %s33, 5
      %p152 = por %p150, %p151
      %p154 = scmp.ne.s32.totalorder %s139, %s153
      %p155 = scmp.eq.s32.totalorder %s33, 0
      %p156 = por %p154, %p155
      %s158 = sadd.s32 %s157, 1
      %p161 = scmp.eq.s32.totalorder %s27, 5
      %p162 = scmp.ne.s32.totalorder %s157, %s159
      %p163 = scmp.eq.s32.totalorder %s27, 0
      %p164 = por %p162, %p163
      %p165 = scmp.ne.s32.totalorder %s157, %s159
      %p166 = scmp.eq.s32.totalorder %s32, 5
      %p167 = por %p165, %p166
      %p168 = scmp.ne.s32.totalorder %s159, %s160
      %p169 = scmp.eq.s32.totalorder %s32, 0
      %p170 = por %p168, %p169
      %p171 = scmp.ne.s32.totalorder %s159, %s160
      %p172 = scmp.eq.s32.totalorder %s33, 5
      %p173 = por %p171, %p172
      %p175 = scmp.ne.s32.totalorder %s160, %s174
      %p176 = scmp.eq.s32.totalorder %s33, 0
      %p177 = por %p175, %p176
      %s179 = sadd.s32 %s178, 1
      %p182 = scmp.eq.s32.totalorder %s27, 5
      %p183 = scmp.ne.s32.totalorder %s178, %s180
      %p184 = scmp.eq.s32.totalorder %s27, 0
      %p185 = por %p183, %p184
      %p186 = scmp.ne.s32.totalorder %s178, %s180
      %p187 = scmp.eq.s32.totalorder %s32, 5
      %p188 = por %p186, %p187
      %p189 = scmp.ne.s32.totalorder %s180, %s181
      %p190 = scmp.eq.s32.totalorder %s32, 0
      %p191 = por %p189, %p190
      %p192 = scmp.ne.s32.totalorder %s180, %s181
      %p193 = scmp.eq.s32.totalorder %s33, 5
      %p194 = por %p192, %p193
      %p196 = scmp.ne.s32.totalorder %s181, %s195
      %p197 = scmp.eq.s32.totalorder %s33, 0
      %p198 = por %p196, %p197
      %s199 = ssub.s32 %s35, %s42
      %p200 = scmp.eq.s32.totalorder %s199, 0
      %s202 = sadd.s32 %s201, 1
      %s203 = scalar_select %p200, %s201, %s202
      %p206 = pneg %p200
      %p207 = scmp.eq.s32.totalorder %s27, 5
      %p208 = por %p206, %p207
      %p209 = scmp.ne.s32.totalorder %s201, %s204
      %p210 = scmp.eq.s32.totalorder %s27, 0
      %p211 = por %p209, %p210
      %p212 = scmp.ne.s32.totalorder %s201, %s204
      %p213 = scmp.eq.s32.totalorder %s32, 5
      %p214 = por %p212, %p213
      %p215 = scmp.ne.s32.totalorder %s204, %s205
      %p216 = scmp.eq.s32.totalorder %s32, 0
      %p217 = por %p215, %p216
      %p218 = scmp.ne.s32.totalorder %s204, %s205
      %p219 = scmp.eq.s32.totalorder %s33, 5
      %p220 = por %p218, %p219
      %p222 = scmp.ne.s32.totalorder %s205, %s221
      %p223 = scmp.eq.s32.totalorder %s33, 0
      %p224 = por %p222, %p223
      %s225 = ssub.s32 %s35, %s42
      %p226 = scmp.eq.s32.totalorder %s225, 0
      %s228 = sadd.s32 %s227, 1
      %s229 = scalar_select %p226, %s227, %s228
      %p232 = pneg %p226
      %p233 = scmp.eq.s32.totalorder %s27, 5
      %p234 = por %p232, %p233
      %p235 = scmp.ne.s32.totalorder %s227, %s230
      %p236 = scmp.eq.s32.totalorder %s27, 0
      %p237 = por %p235, %p236
      %p238 = scmp.ne.s32.totalorder %s227, %s230
      %p239 = scmp.eq.s32.totalorder %s32, 5
      %p240 = por %p238, %p239
      %p241 = scmp.ne.s32.totalorder %s230, %s231
      %p242 = scmp.eq.s32.totalorder %s32, 0
      %p243 = por %p241, %p242
      %p244 = scmp.ne.s32.totalorder %s230, %s231
      %p245 = scmp.eq.s32.totalorder %s33, 5
      %p246 = por %p244, %p245
      %p248 = scmp.ne.s32.totalorder %s231, %s247
      %p249 = scmp.eq.s32.totalorder %s33, 0
      %p250 = por %p248, %p249
      %p251 = scmp.le.s32.totalorder 1, %s27
      %p252 = scmp.lt.s32.totalorder %s27, 7
      %p253 = pnand %p251, %p252
      %p254 = pneg %p253
      // Predicated region
      $region9: #{tpu_custom_call.1} parent=5 // pred_check
        _
      $region10: #{tpu_custom_call.1} parent=5 // pred_check_branch
        %256 = sbr.rel (%p253) target = $region12
      $region11: #{tpu_custom_call.1} parent=5 // pred_region
        %s257 = ssub.s32 %s27, 1
        // Predicated region
        $region13: #{tpu_custom_call.1} parent=11 // pred_check
          %p258 = pneg %p86
        $region14: #{tpu_custom_call.1} parent=11 // pred_check_branch
          %260 = sbr.rel (%p258) target = $region16
        $region15: #{tpu_custom_call.1} parent=11 // pred_region
          %s262 = ssub.s32 64, 64
          %263 = vsyncadd [#allocation10], %s262
          %s265 = sshll.u32 [#allocation9], 4
          %s266 = int_to_ptr.vmem [resolvable:$true] %s265
          %268 = dma.hbm_to_vmem [thread:$0]  %s1, 64, %s266, [#allocation10]
        $region16: #{tpu_custom_call.1} parent=11 // pred_fallthru
          _
        // Predicated region
        $region17: #{tpu_custom_call.1} parent=11 // pred_check
          %p269 = pneg %p107
        $region18: #{tpu_custom_call.1} parent=11 // pred_check_branch
          %271 = sbr.rel (%p269) target = $region20
        $region19: #{tpu_custom_call.1} parent=11 // pred_region
          %s273 = ssub.s32 64, 64
          %274 = vsyncadd [#allocation10], %s273
          %s276 = sshll.u32 [#allocation11], 4
          %s277 = int_to_ptr.vmem [resolvable:$true] %s276
          %279 = dma.hbm_to_vmem [thread:$0]  %s2, 64, %s277, [#allocation10]
        $region20: #{tpu_custom_call.1} parent=11 // pred_fallthru
          _
        // Predicated region
        $region21: #{tpu_custom_call.1} parent=11 // pred_check
          %p280 = pneg %p128
        $region22: #{tpu_custom_call.1} parent=11 // pred_check_branch
          %282 = sbr.rel (%p280) target = $region24
        $region23: #{tpu_custom_call.1} parent=11 // pred_region
          %s284 = ssub.s32 256, 256
          %285 = vsyncadd [#allocation13], %s284
          %s286 = sshll.u32 [#allocation12], 4
          %s287 = int_to_ptr.vmem [resolvable:$true] %s286
          %292 = dma.hbm_to_vmem [thread:$0]  %s3, 256, %s287, [#allocation13], 128, 128, 8
        $region24: #{tpu_custom_call.1} parent=11 // pred_fallthru
          _
        // Predicated region
        $region25: #{tpu_custom_call.1} parent=11 // pred_check
          %p293 = pneg %p149
        $region26: #{tpu_custom_call.1} parent=11 // pred_check_branch
          %295 = sbr.rel (%p293) target = $region28
        $region27: #{tpu_custom_call.1} parent=11 // pred_region
          %s297 = ssub.s32 32, 32
          %298 = vsyncadd [#allocation13], %s297
          %s300 = sshll.u32 [#allocation14], 4
          %s301 = int_to_ptr.vmem [resolvable:$true] %s300
          %303 = dma.hbm_to_vmem [thread:$0]  %s4, 32, %s301, [#allocation13]
        $region28: #{tpu_custom_call.1} parent=11 // pred_fallthru
          _
        // Predicated region
        $region29: #{tpu_custom_call.1} parent=11 // pred_check
          %p304 = pneg %p170
        $region30: #{tpu_custom_call.1} parent=11 // pred_check_branch
          %306 = sbr.rel (%p304) target = $region32
        $region31: #{tpu_custom_call.1} parent=11 // pred_region
          %s308 = ssub.s32 32, 32
          %309 = vsyncadd [#allocation16], %s308
          %s311 = sshll.u32 [#allocation15], 4
          %s312 = int_to_ptr.vmem [resolvable:$true] %s311
          %314 = dma.hbm_to_vmem [thread:$0]  %s5, 32, %s312, [#allocation16]
        $region32: #{tpu_custom_call.1} parent=11 // pred_fallthru
          _
        // Predicated region
        $region33: #{tpu_custom_call.1} parent=11 // pred_check
          %p315 = pneg %p191
        $region34: #{tpu_custom_call.1} parent=11 // pred_check_branch
          %317 = sbr.rel (%p315) target = $region36
        $region35: #{tpu_custom_call.1} parent=11 // pred_region
          %s319 = ssub.s32 16, 16
          %320 = vsyncadd [#allocation16], %s319
          %s322 = sshll.u32 [#allocation17], 4
          %s323 = int_to_ptr.vmem [resolvable:$true] %s322
          %325 = dma.hbm_to_vmem [thread:$0]  %s6, 16, %s323, [#allocation16]
        $region36: #{tpu_custom_call.1} parent=11 // pred_fallthru
          _
      $region12: #{tpu_custom_call.1} parent=5 // pred_fallthru
        _
      %p326 = scmp.lt.s32.totalorder %s27, 6
      // Predicated region
      $region37: #{tpu_custom_call.1} parent=5 // pred_check
        %p327 = pneg %p326
      $region38: #{tpu_custom_call.1} parent=5 // pred_check_branch
        %329 = sbr.rel (%p327) target = $region40
      $region39: #{tpu_custom_call.1} parent=5 // pred_region
        // Predicated region
        $region41: #{tpu_custom_call.1} parent=39 // pred_check
          %p330 = pneg %p59
        $region42: #{tpu_custom_call.1} parent=39 // pred_check_branch
          %332 = sbr.rel (%p330) target = $region44
        $region43: #{tpu_custom_call.1} parent=39 // pred_region
          %s333 = sand.u32 %s49, 1
          %s334 = scalar_lea.sflag [#allocation7], %s333
          %s335 = sand.u32 %s49, 1
          %s336 = smul.addr %s335, 256
          %s337 = scalar_lea.vmem [#allocation6], %s336
          %s338 = smul.u32 32, %s35
          %s340 = ssub.s32 4096, 4096
          %341 = vsyncadd %s334, %s340
          %s342 = smul.addr %s338, 128
          %s343 = scalar_lea.hbm %s0, %s342
          %s344 = sshll.u32 %s337, 4
          %s345 = int_to_ptr.vmem [resolvable:$true] %s344
          %350 = dma.hbm_to_vmem [thread:$0]  %s343, 4096, %s345, %s334, 128, 128, 8
        $region44: #{tpu_custom_call.1} parent=39 // pred_fallthru
          _
      $region40: #{tpu_custom_call.1} parent=5 // pred_fallthru
        _
      %p351 = scmp.le.s32.totalorder 1, %s27
      %p352 = scmp.lt.s32.totalorder %s27, 7
      %p353 = pnand %p351, %p352
      %p354 = pneg %p353
      // Predicated region
      $region45: #{tpu_custom_call.1} parent=5 // pred_check
        _
      $region46: #{tpu_custom_call.1} parent=5 // pred_check_branch
        %356 = sbr.rel (%p353) target = $region48
      $region47: #{tpu_custom_call.1} parent=5 // pred_region
        %s357 = ssub.s32 %s27, 1
        %s358 = sand.u32 %s52, 1
        %s359 = scalar_lea.sflag [#allocation7], %s358
        %s360 = sand.u32 %s52, 1
        %s361 = smul.addr %s360, 256
        %s362 = scalar_lea.vmem [#allocation6], %s361
        // Predicated region
        $region49: #{tpu_custom_call.1} parent=47 // pred_check
          %p363 = pneg %p65
        $region50: #{tpu_custom_call.1} parent=47 // pred_check_branch
          %365 = sbr.rel (%p363) target = $region52
        $region51: #{tpu_custom_call.1} parent=47 // pred_region
          %366 = dma.done %s359, 4096
        $region52: #{tpu_custom_call.1} parent=47 // pred_fallthru
          _
        // Predicated region
        $region53: #{tpu_custom_call.1} parent=47 // pred_check
          %p367 = pneg %p86
        $region54: #{tpu_custom_call.1} parent=47 // pred_check_branch
          %369 = sbr.rel (%p367) target = $region56
        $region55: #{tpu_custom_call.1} parent=47 // pred_region
          %370 = dma.done [#allocation10], 64
        $region56: #{tpu_custom_call.1} parent=47 // pred_fallthru
          _
        // Predicated region
        $region57: #{tpu_custom_call.1} parent=47 // pred_check
          %p371 = pneg %p107
        $region58: #{tpu_custom_call.1} parent=47 // pred_check_branch
          %373 = sbr.rel (%p371) target = $region60
        $region59: #{tpu_custom_call.1} parent=47 // pred_region
          %374 = dma.done [#allocation10], 64
        $region60: #{tpu_custom_call.1} parent=47 // pred_fallthru
          _
        // Predicated region
        $region61: #{tpu_custom_call.1} parent=47 // pred_check
          %p375 = pneg %p128
        $region62: #{tpu_custom_call.1} parent=47 // pred_check_branch
          %377 = sbr.rel (%p375) target = $region64
        $region63: #{tpu_custom_call.1} parent=47 // pred_region
          %378 = dma.done [#allocation13], 256
        $region64: #{tpu_custom_call.1} parent=47 // pred_fallthru
          _
        // Predicated region
        $region65: #{tpu_custom_call.1} parent=47 // pred_check
          %p379 = pneg %p149
        $region66: #{tpu_custom_call.1} parent=47 // pred_check_branch
          %381 = sbr.rel (%p379) target = $region68
        $region67: #{tpu_custom_call.1} parent=47 // pred_region
          %382 = dma.done [#allocation13], 32
        $region68: #{tpu_custom_call.1} parent=47 // pred_fallthru
          _
        // Predicated region
        $region69: #{tpu_custom_call.1} parent=47 // pred_check
          %p383 = pneg %p170
        $region70: #{tpu_custom_call.1} parent=47 // pred_check_branch
          %385 = sbr.rel (%p383) target = $region72
        $region71: #{tpu_custom_call.1} parent=47 // pred_region
          %386 = dma.done [#allocation16], 32
        $region72: #{tpu_custom_call.1} parent=47 // pred_fallthru
          _
        // Predicated region
        $region73: #{tpu_custom_call.1} parent=47 // pred_check
          %p387 = pneg %p191
        $region74: #{tpu_custom_call.1} parent=47 // pred_check_branch
          %389 = sbr.rel (%p387) target = $region76
        $region75: #{tpu_custom_call.1} parent=47 // pred_region
          %390 = dma.done [#allocation16], 16
        $region76: #{tpu_custom_call.1} parent=47 // pred_fallthru
          _
        %s391 = sand.u32 %s52, 1
        %s392 = scalar_lea.sflag [#allocation7], %s391
        %s393 = sand.u32 %s52, 1
        %s394 = smul.addr %s393, 256
        %s395 = scalar_lea.vmem [#allocation6], %s394
        %p396 = pneg %p65
        %p397 = pneg %p62
        %p398 = pneg %p86
        %p399 = pneg %p83
        %p400 = pneg %p107
        %p401 = pneg %p104
        %p402 = pneg %p128
        %p403 = pneg %p125
        %p404 = pneg %p149
        %p405 = pneg %p146
        %p406 = pneg %p170
        %p407 = pneg %p167
        %p408 = pneg %p191
        %p409 = pneg %p188
        %p410 = pneg %p217
        %p411 = pneg %p214
        %s412 = sand.u32 %s204, 1
        %s413 = scalar_lea.sflag [#allocation8], %s412
        %s414 = sand.u32 %s204, 1
        %s415 = smul.addr %s414, 256
        %s416 = scalar_lea.vmem [#allocation18], %s415
        %p417 = pneg %p243
        %p418 = pneg %p240
        %s419 = sand.u32 %s230, 1
        %s420 = scalar_lea.sflag [#allocation20], %s419
        %s421 = sand.u32 %s230, 1
        %s422 = scalar_lea.vmem [#allocation19], %s421
        %s423 = smul.u32 32, %s37
        %s424 = smul.u32 32, %s37
        %v425 = vld [vmem:[%s362] sm:$0xff]
        %v426 = vld [vmem:[%s362 + $0x8] sm:$0xff]
        %v427 = vld [vmem:[%s362 + $0x10] sm:$0xff]
        %v428 = vld [vmem:[%s362 + $0x18] sm:$0xff]
        %v429 = vld [vmem:[%s362 + $0x20] sm:$0xff]
        %v430 = vld [vmem:[%s362 + $0x28] sm:$0xff]
        %v431 = vld [vmem:[%s362 + $0x30] sm:$0xff]
        %v432 = vld [vmem:[%s362 + $0x38] sm:$0xff]
        %v433 = vld [vmem:[%s362 + $0x40] sm:$0xff]
        %v434 = vld [vmem:[%s362 + $0x48] sm:$0xff]
        %v435 = vld [vmem:[%s362 + $0x50] sm:$0xff]
        %v436 = vld [vmem:[%s362 + $0x58] sm:$0xff]
        %v437 = vld [vmem:[%s362 + $0x60] sm:$0xff]
        %v438 = vld [vmem:[%s362 + $0x68] sm:$0xff]
        %v439 = vld [vmem:[%s362 + $0x70] sm:$0xff]
        %v440 = vld [vmem:[%s362 + $0x78] sm:$0xff]
        %v441 = vld [vmem:[%s362 + $0x80] sm:$0xff]
        %v442 = vld [vmem:[%s362 + $0x88] sm:$0xff]
        %v443 = vld [vmem:[%s362 + $0x90] sm:$0xff]
        %v444 = vld [vmem:[%s362 + $0x98] sm:$0xff]
        %v445 = vld [vmem:[%s362 + $0xa0] sm:$0xff]
        %v446 = vld [vmem:[%s362 + $0xa8] sm:$0xff]
        %v447 = vld [vmem:[%s362 + $0xb0] sm:$0xff]
        %v448 = vld [vmem:[%s362 + $0xb8] sm:$0xff]
        %v449 = vld [vmem:[%s362 + $0xc0] sm:$0xff]
        %v450 = vld [vmem:[%s362 + $0xc8] sm:$0xff]
        %v451 = vld [vmem:[%s362 + $0xd0] sm:$0xff]
        %v452 = vld [vmem:[%s362 + $0xd8] sm:$0xff]
        %v453 = vld [vmem:[%s362 + $0xe0] sm:$0xff]
        %v454 = vld [vmem:[%s362 + $0xe8] sm:$0xff]
        %v455 = vld [vmem:[%s362 + $0xf0] sm:$0xff]
        %v456 = vld [vmem:[%s362 + $0xf8] sm:$0xff]
        %v457 = vld [vmem:[#allocation9] sm:$0xf]
        %vm458 = vcmask 31744
        %v460 = vsel %vm458, %v425, 0
        %v463 = vsel %vm458, %v426, 0
        %v466 = vsel %vm458, %v427, 0
        %v469 = vsel %vm458, %v428, 0
        %v472 = vsel %vm458, %v429, 0
        %v475 = vsel %vm458, %v430, 0
        %v478 = vsel %vm458, %v431, 0
        %v481 = vsel %vm458, %v432, 0
        %v484 = vsel %vm458, %v433, 0
        %v487 = vsel %vm458, %v434, 0
        %v490 = vsel %vm458, %v435, 0
        %v493 = vsel %vm458, %v436, 0
        %v496 = vsel %vm458, %v437, 0
        %v499 = vsel %vm458, %v438, 0
        %v502 = vsel %vm458, %v439, 0
        %v505 = vsel %vm458, %v440, 0
        %v508 = vsel %vm458, %v441, 0
        %v511 = vsel %vm458, %v442, 0
        %v514 = vsel %vm458, %v443, 0
        %v517 = vsel %vm458, %v444, 0
        %v520 = vsel %vm458, %v445, 0
        %v523 = vsel %vm458, %v446, 0
        %v526 = vsel %vm458, %v447, 0
        %v529 = vsel %vm458, %v448, 0
        %v532 = vsel %vm458, %v449, 0
        %v535 = vsel %vm458, %v450, 0
        %v538 = vsel %vm458, %v451, 0
        %v541 = vsel %vm458, %v452, 0
        %v544 = vsel %vm458, %v453, 0
        %v547 = vsel %vm458, %v454, 0
        %v550 = vsel %vm458, %v455, 0
        %v553 = vsel %vm458, %v456, 0
        %vm555 = vcmask 1043456
        %v557 = vsel %vm555, %v457, 0
        %559 = vmatprep.subr.mxu0 0.0
        %560 = vmatpush1.msra.mxu0 %v557
        %561 = vmatprep.subr.mxu0 0.0
        %562 = vmatpush1.msra.mxu0 0.0
        %563 = vmatprep.subr.mxu0 0.0
        %564 = vmatpush1.msra.mxu0 0.0
        %565 = vmatprep.subr.mxu0 0.0
        %566 = vmatpush1.msra.mxu0 0.0
        %567 = vmatprep.subr.mxu0 0.0
        %568 = vmatpush1.msra.mxu0 0.0
        %569 = vmatprep.subr.mxu0 0.0
        %570 = vmatpush1.msra.mxu0 0.0
        %571 = vmatprep.subr.mxu0 0.0
        %572 = vmatpush1.msra.mxu0 0.0
        %573 = vmatprep.subr.mxu0 0.0
        %574 = vmatpush1.msra.mxu0 0.0
        %575 = vmatprep.subr.mxu0 0.0
        %576 = vmatpush1.msra.mxu0 0.0
        %577 = vmatprep.subr.mxu0 0.0
        %578 = vmatpush1.msra.mxu0 0.0
        %579 = vmatprep.subr.mxu0 0.0
        %580 = vmatpush1.msra.mxu0 0.0
        %581 = vmatprep.subr.mxu0 0.0
        %582 = vmatpush1.msra.mxu0 0.0
        %583 = vmatprep.subr.mxu0 0.0
        %584 = vmatpush1.msra.mxu0 0.0
        %585 = vmatprep.subr.mxu0 0.0
        %586 = vmatpush1.msra.mxu0 0.0
        %587 = vmatprep.subr.mxu0 0.0
        %588 = vmatpush1.msra.mxu0 0.0
        %589 = vmatprep.subr.mxu0 0.0
        %590 = vmatpush1.msra.mxu0 0.0
        %591 = vmatprep.subr.mxu0 0.0
        %592 = vmatpush1.msra.mxu0 0.0
        %593 = vmatprep.subr.mxu0 0.0
        %594 = vmatpush1.msra.mxu0 0.0
        %595 = vmatprep.subr.mxu0 0.0
        %596 = vmatpush1.msra.mxu0 0.0
        %597 = vmatprep.subr.mxu0 0.0
        %598 = vmatpush1.msra.mxu0 0.0
        %599 = vmatprep.subr.mxu0 0.0
        %600 = vmatpush1.msra.mxu0 0.0
        %601 = vmatprep.subr.mxu0 0.0
        %602 = vmatpush1.msra.mxu0 0.0
        %603 = vmatprep.subr.mxu0 0.0
        %604 = vmatpush1.msra.mxu0 0.0
        %605 = vmatprep.subr.mxu0 0.0
        %606 = vmatpush1.msra.mxu0 0.0
        %607 = vmatprep.subr.mxu0 0.0
        %608 = vmatpush1.msra.mxu0 0.0
        %609 = vmatprep.subr.mxu0 0.0
        %610 = vmatpush1.msra.mxu0 0.0
        %611 = vmatprep.subr.mxu0 0.0
        %612 = vmatpush1.msra.mxu0 0.0
        %613 = vmatprep.subr.mxu0 0.0
        %614 = vmatpush1.msra.mxu0 0.0
        %615 = vmatprep.subr.mxu0 0.0
        %616 = vmatpush1.msra.mxu0 0.0
        %617 = vmatprep.subr.mxu0 0.0
        %618 = vmatpush1.msra.mxu0 0.0
        %619 = vmatprep.subr.mxu0 0.0
        %620 = vmatpush1.msra.mxu0 0.0
        %621 = vmatprep.subr.mxu0 0.0
        %622 = vmatpush1.msra.mxu0 0.0
        %623 = vmatprep.mubr.f32.mxu0 0.0
        %624 = vmatmul.mubr.f32.gmra.mrb[0].mxu0 %v460
        %v625 = vpop.f32.mrb[0].mxu0
        %v626 = vadd.f32 0.0, %v625
        %v627 = vpop.f32.mrb[0].mxu0
        %628 = vmatprep.mubr.f32.mxu0 0.0
        %629 = vmatmul.mubr.f32.gmra.mrb[0].mxu0 %v463
        %v630 = vpop.f32.mrb[0].mxu0
        %v631 = vadd.f32 0.0, %v630
        %v632 = vpop.f32.mrb[0].mxu0
        %633 = vmatprep.mubr.f32.mxu0 0.0
        %634 = vmatmul.mubr.f32.gmra.mrb[0].mxu0 %v466
        %v635 = vpop.f32.mrb[0].mxu0
        %v636 = vadd.f32 0.0, %v635
        %v637 = vpop.f32.mrb[0].mxu0
        %638 = vmatprep.mubr.f32.mxu0 0.0
        %639 = vmatmul.mubr.f32.gmra.mrb[0].mxu0 %v469
        %v640 = vpop.f32.mrb[0].mxu0
        %v641 = vadd.f32 0.0, %v640
        %v642 = vpop.f32.mrb[0].mxu0
        %643 = vmatprep.mubr.f32.mxu0 0.0
        %644 = vmatmul.mubr.f32.gmra.mrb[0].mxu0 %v472
        %v645 = vpop.f32.mrb[0].mxu0
        %v646 = vadd.f32 0.0, %v645
        %v647 = vpop.f32.mrb[0].mxu0
        %648 = vmatprep.mubr.f32.mxu0 0.0
        %649 = vmatmul.mubr.f32.gmra.mrb[0].mxu0 %v475
        %v650 = vpop.f32.mrb[0].mxu0
        %v651 = vadd.f32 0.0, %v650
        %v652 = vpop.f32.mrb[0].mxu0
        %653 = vmatprep.mubr.f32.mxu0 0.0
        %654 = vmatmul.mubr.f32.gmra.mrb[0].mxu0 %v478
        %v655 = vpop.f32.mrb[0].mxu0
        %v656 = vadd.f32 0.0, %v655
        %v657 = vpop.f32.mrb[0].mxu0
        %658 = vmatprep.mubr.f32.mxu0 0.0
        %659 = vmatmul.mubr.f32.gmra.mrb[0].mxu0 %v481
        %v660 = vpop.f32.mrb[0].mxu0
        %v661 = vadd.f32 0.0, %v660
        %v662 = vpop.f32.mrb[0].mxu0
        %663 = vmatprep.mubr.f32.mxu0 0.0
        %664 = vmatmul.mubr.f32.gmra.mrb[0].mxu0 %v484
        %v665 = vpop.f32.mrb[0].mxu0
        %v666 = vadd.f32 0.0, %v665
        %v667 = vpop.f32.mrb[0].mxu0
        %668 = vmatprep.mubr.f32.mxu0 0.0
        %669 = vmatmul.mubr.f32.gmra.mrb[0].mxu0 %v487
        %v670 = vpop.f32.mrb[0].mxu0
        %v671 = vadd.f32 0.0, %v670
        %v672 = vpop.f32.mrb[0].mxu0
        %673 = vmatprep.mubr.f32.mxu0 0.0
        %674 = vmatmul.mubr.f32.gmra.mrb[0].mxu0 %v490
        %v675 = vpop.f32.mrb[0].mxu0
        %v676 = vadd.f32 0.0, %v675
        %v677 = vpop.f32.mrb[0].mxu0
        %678 = vmatprep.mubr.f32.mxu0 0.0
        %679 = vmatmul.mubr.f32.gmra.mrb[0].mxu0 %v493
        %v680 = vpop.f32.mrb[0].mxu0
        %v681 = vadd.f32 0.0, %v680
        %v682 = vpop.f32.mrb[0].mxu0
        %683 = vmatprep.mubr.f32.mxu0 0.0
        %684 = vmatmul.mubr.f32.gmra.mrb[0].mxu0 %v496
        %v685 = vpop.f32.mrb[0].mxu0
        %v686 = vadd.f32 0.0, %v685
        %v687 = vpop.f32.mrb[0].mxu0
        %688 = vmatprep.mubr.f32.mxu0 0.0
        %689 = vmatmul.mubr.f32.gmra.mrb[0].mxu0 %v499
        %v690 = vpop.f32.mrb[0].mxu0
        %v691 = vadd.f32 0.0, %v690
        %v692 = vpop.f32.mrb[0].mxu0
        %693 = vmatprep.mubr.f32.mxu0 0.0
        %694 = vmatmul.mubr.f32.gmra.mrb[0].mxu0 %v502
        %v695 = vpop.f32.mrb[0].mxu0
        %v696 = vadd.f32 0.0, %v695
        %v697 = vpop.f32.mrb[0].mxu0
        %698 = vmatprep.mubr.f32.mxu0 0.0
        %699 = vmatmul.mubr.f32.gmra.mrb[0].mxu0 %v505
        %v700 = vpop.f32.mrb[0].mxu0
        %v701 = vadd.f32 0.0, %v700
        %v702 = vpop.f32.mrb[0].mxu0
        %703 = vmatprep.mubr.f32.mxu0 0.0
        %704 = vmatmul.mubr.f32.gmra.mrb[0].mxu0 %v508
        %v705 = vpop.f32.mrb[0].mxu0
        %v706 = vadd.f32 0.0, %v705
        %v707 = vpop.f32.mrb[0].mxu0
        %708 = vmatprep.mubr.f32.mxu0 0.0
        %709 = vmatmul.mubr.f32.gmra.mrb[0].mxu0 %v511
        %v710 = vpop.f32.mrb[0].mxu0
        %v711 = vadd.f32 0.0, %v710
        %v712 = vpop.f32.mrb[0].mxu0
        %713 = vmatprep.mubr.f32.mxu0 0.0
        %714 = vmatmul.mubr.f32.gmra.mrb[0].mxu0 %v514
        %v715 = vpop.f32.mrb[0].mxu0
        %v716 = vadd.f32 0.0, %v715
        %v717 = vpop.f32.mrb[0].mxu0
        %718 = vmatprep.mubr.f32.mxu0 0.0
        %719 = vmatmul.mubr.f32.gmra.mrb[0].mxu0 %v517
        %v720 = vpop.f32.mrb[0].mxu0
        %v721 = vadd.f32 0.0, %v720
        %v722 = vpop.f32.mrb[0].mxu0
        %723 = vmatprep.mubr.f32.mxu0 0.0
        %724 = vmatmul.mubr.f32.gmra.mrb[0].mxu0 %v520
        %v725 = vpop.f32.mrb[0].mxu0
        %v726 = vadd.f32 0.0, %v725
        %v727 = vpop.f32.mrb[0].mxu0
        %728 = vmatprep.mubr.f32.mxu0 0.0
        %729 = vmatmul.mubr.f32.gmra.mrb[0].mxu0 %v523
        %v730 = vpop.f32.mrb[0].mxu0
        %v731 = vadd.f32 0.0, %v730
        %v732 = vpop.f32.mrb[0].mxu0
        %733 = vmatprep.mubr.f32.mxu0 0.0
        %734 = vmatmul.mubr.f32.gmra.mrb[0].mxu0 %v526
        %v735 = vpop.f32.mrb[0].mxu0
        %v736 = vadd.f32 0.0, %v735
        %v737 = vpop.f32.mrb[0].mxu0
        %738 = vmatprep.mubr.f32.mxu0 0.0
        %739 = vmatmul.mubr.f32.gmra.mrb[0].mxu0 %v529
        %v740 = vpop.f32.mrb[0].mxu0
        %v741 = vadd.f32 0.0, %v740
        %v742 = vpop.f32.mrb[0].mxu0
        %743 = vmatprep.mubr.f32.mxu0 0.0
        %744 = vmatmul.mubr.f32.gmra.mrb[0].mxu0 %v532
        %v745 = vpop.f32.mrb[0].mxu0
        %v746 = vadd.f32 0.0, %v745
        %v747 = vpop.f32.mrb[0].mxu0
        %748 = vmatprep.mubr.f32.mxu0 0.0
        %749 = vmatmul.mubr.f32.gmra.mrb[0].mxu0 %v535
        %v750 = vpop.f32.mrb[0].mxu0
        %v751 = vadd.f32 0.0, %v750
        %v752 = vpop.f32.mrb[0].mxu0
        %753 = vmatprep.mubr.f32.mxu0 0.0
        %754 = vmatmul.mubr.f32.gmra.mrb[0].mxu0 %v538
        %v755 = vpop.f32.mrb[0].mxu0
        %v756 = vadd.f32 0.0, %v755
        %v757 = vpop.f32.mrb[0].mxu0
        %758 = vmatprep.mubr.f32.mxu0 0.0
        %759 = vmatmul.mubr.f32.gmra.mrb[0].mxu0 %v541
        %v760 = vpop.f32.mrb[0].mxu0
        %v761 = vadd.f32 0.0, %v760
        %v762 = vpop.f32.mrb[0].mxu0
        %763 = vmatprep.mubr.f32.mxu0 0.0
        %764 = vmatmul.mubr.f32.gmra.mrb[0].mxu0 %v544
        %v765 = vpop.f32.mrb[0].mxu0
        %v766 = vadd.f32 0.0, %v765
        %v767 = vpop.f32.mrb[0].mxu0
        %768 = vmatprep.mubr.f32.mxu0 0.0
        %769 = vmatmul.mubr.f32.gmra.mrb[0].mxu0 %v547
        %v770 = vpop.f32.mrb[0].mxu0
        %v771 = vadd.f32 0.0, %v770
        %v772 = vpop.f32.mrb[0].mxu0
        %773 = vmatprep.mubr.f32.mxu0 0.0
        %774 = vmatmul.mubr.f32.gmra.mrb[0].mxu0 %v550
        %v775 = vpop.f32.mrb[0].mxu0
        %v776 = vadd.f32 0.0, %v775
        %v777 = vpop.f32.mrb[0].mxu0
        %778 = vmatprep.mubr.f32.mxu0 0.0
        %779 = vmatmul.mubr.f32.gmra.mrb[0].mxu0 %v553
        %v780 = vpop.f32.mrb[0].mxu0
        %v781 = vadd.f32 0.0, %v780
        %v782 = vpop.f32.mrb[0].mxu0
        %783 = vdwg.mxu0
        %p784 = scmp.eq.s32.totalorder %s36, 0
        %p785 = scmp.eq.s32.totalorder %s37, 0
        %p786 = pnand %p784, %p785
        %p787 = pneg %p786
        // Predicated region
        $region77: #{tpu_custom_call.1} parent=47 // pred_check
          _
        $region78: #{tpu_custom_call.1} parent=47 // pred_check_branch
          %789 = sbr.rel (%p786) target = $region80
        $region79: #{tpu_custom_call.1} parent=47 // pred_region
          %vm790 = vcmask 24576
          %791 = vst.msk [vmem:[#allocation2] sm:$0x1] %vm790, 0.0
          %792 = vst.msk [vmem:[#allocation3] sm:$0x1] %vm790, 0.0
        $region80: #{tpu_custom_call.1} parent=47 // pred_fallthru
          _
        // Predicated region
        $region81: #{tpu_custom_call.1} parent=47 // pred_check
          %p793 = pneg %p784
        $region82: #{tpu_custom_call.1} parent=47 // pred_check_branch
          %795 = sbr.rel (%p793) target = $region84
        $region83: #{tpu_custom_call.1} parent=47 // pred_region
          %v796 = vld [vmem:[#allocation2] sm:$0x1]
          %v797 = vsel %vm458, %v626, 0.0
          %v798 = vsel %vm458, %v631, 0.0
          %v799 = vadd.f32 %v797, %v798
          %v800 = vsel %vm458, %v636, 0.0
          %v801 = vadd.f32 %v799, %v800
          %v802 = vsel %vm458, %v641, 0.0
          %v803 = vadd.f32 %v801, %v802
          %v804 = vsel %vm458, %v646, 0.0
          %v805 = vadd.f32 %v803, %v804
          %v806 = vsel %vm458, %v651, 0.0
          %v807 = vadd.f32 %v805, %v806
          %v808 = vsel %vm458, %v656, 0.0
          %v809 = vadd.f32 %v807, %v808
          %v810 = vsel %vm458, %v661, 0.0
          %v811 = vadd.f32 %v809, %v810
          %v812 = vsel %vm458, %v666, 0.0
          %v813 = vadd.f32 %v811, %v812
          %v814 = vsel %vm458, %v671, 0.0
          %v815 = vadd.f32 %v813, %v814
          %v816 = vsel %vm458, %v676, 0.0
          %v817 = vadd.f32 %v815, %v816
          %v818 = vsel %vm458, %v681, 0.0
          %v819 = vadd.f32 %v817, %v818
          %v820 = vsel %vm458, %v686, 0.0
          %v821 = vadd.f32 %v819, %v820
          %v822 = vsel %vm458, %v691, 0.0
          %v823 = vadd.f32 %v821, %v822
          %v824 = vsel %vm458, %v696, 0.0
          %v825 = vadd.f32 %v823, %v824
          %v826 = vsel %vm458, %v701, 0.0
          %v827 = vadd.f32 %v825, %v826
          %v828 = vsel %vm458, %v706, 0.0
          %v829 = vadd.f32 %v827, %v828
          %v830 = vsel %vm458, %v711, 0.0
          %v831 = vadd.f32 %v829, %v830
          %v832 = vsel %vm458, %v716, 0.0
          %v833 = vadd.f32 %v831, %v832
          %v834 = vsel %vm458, %v721, 0.0
          %v835 = vadd.f32 %v833, %v834
          %v836 = vsel %vm458, %v726, 0.0
          %v837 = vadd.f32 %v835, %v836
          %v838 = vsel %vm458, %v731, 0.0
          %v839 = vadd.f32 %v837, %v838
          %v840 = vsel %vm458, %v736, 0.0
          %v841 = vadd.f32 %v839, %v840
          %v842 = vsel %vm458, %v741, 0.0
          %v843 = vadd.f32 %v841, %v842
          %v844 = vsel %vm458, %v746, 0.0
          %v845 = vadd.f32 %v843, %v844
          %v846 = vsel %vm458, %v751, 0.0
          %v847 = vadd.f32 %v845, %v846
          %v848 = vsel %vm458, %v756, 0.0
          %v849 = vadd.f32 %v847, %v848
          %v850 = vsel %vm458, %v761, 0.0
          %v851 = vadd.f32 %v849, %v850
          %v852 = vsel %vm458, %v766, 0.0
          %v853 = vadd.f32 %v851, %v852
          %v854 = vsel %vm458, %v771, 0.0
          %v855 = vadd.f32 %v853, %v854
          %v856 = vsel %vm458, %v776, 0.0
          %v857 = vadd.f32 %v855, %v856
          %v858 = vsel %vm458, %v781, 0.0
          %v859 = vadd.f32 %v857, %v858
          %v860 = vrot.slane %v859, 4
          %v861 = vadd.f32 %v859, %v860
          %v862 = vrot.slane %v861, 2
          %v863 = vadd.f32 %v861, %v862
          %v864 = vrot.slane %v863, 1
          %v865 = vadd.f32 %v863, %v864
          %v866 = vadd.f32 %v796, %v865
          %vm867 = vcmask 24576
          %868 = vst.msk [vmem:[#allocation2] sm:$0x1] %vm867, %v866
          %v869 = vld [vmem:[#allocation3] sm:$0x1]
          %v870 = vmul.f32 %v626, %v626
          %v871 = vmul.f32 %v631, %v631
          %v872 = vmul.f32 %v636, %v636
          %v873 = vmul.f32 %v641, %v641
          %v874 = vmul.f32 %v646, %v646
          %v875 = vmul.f32 %v651, %v651
          %v876 = vmul.f32 %v656, %v656
          %v877 = vmul.f32 %v661, %v661
          %v878 = vmul.f32 %v666, %v666
          %v879 = vmul.f32 %v671, %v671
          %v880 = vmul.f32 %v676, %v676
          %v881 = vmul.f32 %v681, %v681
          %v882 = vmul.f32 %v686, %v686
          %v883 = vmul.f32 %v691, %v691
          %v884 = vmul.f32 %v696, %v696
          %v885 = vmul.f32 %v701, %v701
          %v886 = vmul.f32 %v706, %v706
          %v887 = vmul.f32 %v711, %v711
          %v888 = vmul.f32 %v716, %v716
          %v889 = vmul.f32 %v721, %v721
          %v890 = vmul.f32 %v726, %v726
          %v891 = vmul.f32 %v731, %v731
          %v892 = vmul.f32 %v736, %v736
          %v893 = vmul.f32 %v741, %v741
          %v894 = vmul.f32 %v746, %v746
          %v895 = vmul.f32 %v751, %v751
          %v896 = vmul.f32 %v756, %v756
          %v897 = vmul.f32 %v761, %v761
          %v898 = vmul.f32 %v766, %v766
          %v899 = vmul.f32 %v771, %v771
          %v900 = vmul.f32 %v776, %v776
          %v901 = vmul.f32 %v781, %v781
          %v902 = vsel %vm458, %v870, 0.0
          %v903 = vsel %vm458, %v871, 0.0
          %v904 = vadd.f32 %v902, %v903
          %v905 = vsel %vm458, %v872, 0.0
          %v906 = vadd.f32 %v904, %v905
          %v907 = vsel %vm458, %v873, 0.0
          %v908 = vadd.f32 %v906, %v907
          %v909 = vsel %vm458, %v874, 0.0
          %v910 = vadd.f32 %v908, %v909
          %v911 = vsel %vm458, %v875, 0.0
          %v912 = vadd.f32 %v910, %v911
          %v913 = vsel %vm458, %v876, 0.0
          %v914 = vadd.f32 %v912, %v913
          %v915 = vsel %vm458, %v877, 0.0
          %v916 = vadd.f32 %v914, %v915
          %v917 = vsel %vm458, %v878, 0.0
          %v918 = vadd.f32 %v916, %v917
          %v919 = vsel %vm458, %v879, 0.0
          %v920 = vadd.f32 %v918, %v919
          %v921 = vsel %vm458, %v880, 0.0
          %v922 = vadd.f32 %v920, %v921
          %v923 = vsel %vm458, %v881, 0.0
          %v924 = vadd.f32 %v922, %v923
          %v925 = vsel %vm458, %v882, 0.0
          %v926 = vadd.f32 %v924, %v925
          %v927 = vsel %vm458, %v883, 0.0
          %v928 = vadd.f32 %v926, %v927
          %v929 = vsel %vm458, %v884, 0.0
          %v930 = vadd.f32 %v928, %v929
          %v931 = vsel %vm458, %v885, 0.0
          %v932 = vadd.f32 %v930, %v931
          %v933 = vsel %vm458, %v886, 0.0
          %v934 = vadd.f32 %v932, %v933
          %v935 = vsel %vm458, %v887, 0.0
          %v936 = vadd.f32 %v934, %v935
          %v937 = vsel %vm458, %v888, 0.0
          %v938 = vadd.f32 %v936, %v937
          %v939 = vsel %vm458, %v889, 0.0
          %v940 = vadd.f32 %v938, %v939
          %v941 = vsel %vm458, %v890, 0.0
          %v942 = vadd.f32 %v940, %v941
          %v943 = vsel %vm458, %v891, 0.0
          %v944 = vadd.f32 %v942, %v943
          %v945 = vsel %vm458, %v892, 0.0
          %v946 = vadd.f32 %v944, %v945
          %v947 = vsel %vm458, %v893, 0.0
          %v948 = vadd.f32 %v946, %v947
          %v949 = vsel %vm458, %v894, 0.0
          %v950 = vadd.f32 %v948, %v949
          %v951 = vsel %vm458, %v895, 0.0
          %v952 = vadd.f32 %v950, %v951
          %v953 = vsel %vm458, %v896, 0.0
          %v954 = vadd.f32 %v952, %v953
          %v955 = vsel %vm458, %v897, 0.0
          %v956 = vadd.f32 %v954, %v955
          %v957 = vsel %vm458, %v898, 0.0
          %v958 = vadd.f32 %v956, %v957
          %v959 = vsel %vm458, %v899, 0.0
          %v960 = vadd.f32 %v958, %v959
          %v961 = vsel %vm458, %v900, 0.0
          %v962 = vadd.f32 %v960, %v961
          %v963 = vsel %vm458, %v901, 0.0
          %v964 = vadd.f32 %v962, %v963
          %v965 = vrot.slane %v964, 4
          %v966 = vadd.f32 %v964, %v965
          %v967 = vrot.slane %v966, 2
          %v968 = vadd.f32 %v966, %v967
          %v969 = vrot.slane %v968, 1
          %v970 = vadd.f32 %v968, %v969
          %v971 = vadd.f32 %v869, %v970
          %972 = vst.msk [vmem:[#allocation3] sm:$0x1] %vm867, %v971
        $region84: #{tpu_custom_call.1} parent=47 // pred_fallthru
          _
        %p973 = scmp.eq.s32.totalorder %s36, 1
        %p974 = pnand %p973, %p785
        %p975 = pneg %p974
        // Predicated region
        $region85: #{tpu_custom_call.1} parent=47 // pred_check
          _
        $region86: #{tpu_custom_call.1} parent=47 // pred_check_branch
          %977 = sbr.rel (%p974) target = $region88
        $region87: #{tpu_custom_call.1} parent=47 // pred_region
          %vm978 = vcmask 65536
          %979 = vst.msk [vmem:[#allocation4] sm:$0x1] %vm978, 0.0
          %980 = vst.msk [vmem:[#allocation5] sm:$0x1] %vm978, 0.0
        $region88: #{tpu_custom_call.1} parent=47 // pred_fallthru
          _
        // Predicated region
        $region89: #{tpu_custom_call.1} parent=47 // pred_check
          %p981 = pneg %p973
        $region90: #{tpu_custom_call.1} parent=47 // pred_check_branch
          %983 = sbr.rel (%p981) target = $region92
        $region91: #{tpu_custom_call.1} parent=47 // pred_region
          %v984 = vld [vmem:[#allocation2] sm:$0x1]
          %v985 = vmul.f32 %v984, 0.001953125
          %v986 = vld [vmem:[#allocation3] sm:$0x1]
          %v987 = vmul.f32 %v986, 0.001953125
          %v988 = vmul.f32 %v985, %v985
          %v989 = vsub.f32 %v987, %v988
          %v990 = vmax.f32 %v989, 0.0
          %v991 = vld [vmem:[#allocation14] sm:$0x1]
          %v992 = vadd.f32 %v990, 1e-05
          %v993 = vrsqrt.pop %v992
          %v994 = vmul.f32 %v991, %v993
          %v995 = vld [vmem:[#allocation14 + $0x1] sm:$0x1]
          %v996 = vmul.f32 %v985, %v994
          %v997 = vsub.f32 %v995, %v996
          %v998 = vlaneseq
          %v999 = vshrl.u32 %v998, 7
          %v1000 = vsub.s32 0, %v999
          %v1001 = vrot.slane %v994, %v1000
          %v1002 = vmul.f32 %v626, %v1001
          %v1003 = vmul.f32 %v631, %v1001
          %v1004 = vmul.f32 %v636, %v1001
          %v1005 = vmul.f32 %v641, %v1001
          %v1006 = vmul.f32 %v646, %v1001
          %v1007 = vmul.f32 %v651, %v1001
          %v1008 = vmul.f32 %v656, %v1001
          %v1009 = vmul.f32 %v661, %v1001
          %v1010 = vmul.f32 %v666, %v1001
          %v1011 = vmul.f32 %v671, %v1001
          %v1012 = vmul.f32 %v676, %v1001
          %v1013 = vmul.f32 %v681, %v1001
          %v1014 = vmul.f32 %v686, %v1001
          %v1015 = vmul.f32 %v691, %v1001
          %v1016 = vmul.f32 %v696, %v1001
          %v1017 = vmul.f32 %v701, %v1001
          %v1018 = vmul.f32 %v706, %v1001
          %v1019 = vmul.f32 %v711, %v1001
          %v1020 = vmul.f32 %v716, %v1001
          %v1021 = vmul.f32 %v721, %v1001
          %v1022 = vmul.f32 %v726, %v1001
          %v1023 = vmul.f32 %v731, %v1001
          %v1024 = vmul.f32 %v736, %v1001
          %v1025 = vmul.f32 %v741, %v1001
          %v1026 = vmul.f32 %v746, %v1001
          %v1027 = vmul.f32 %v751, %v1001
          %v1028 = vmul.f32 %v756, %v1001
          %v1029 = vmul.f32 %v761, %v1001
          %v1030 = vmul.f32 %v766, %v1001
          %v1031 = vmul.f32 %v771, %v1001
          %v1032 = vmul.f32 %v776, %v1001
          %v1033 = vmul.f32 %v781, %v1001
          %v1034 = vlaneseq
          %v1035 = vshrl.u32 %v1034, 7
          %v1036 = vsub.s32 0, %v1035
          %v1037 = vrot.slane %v997, %v1036
          %v1038 = vadd.f32 %v1002, %v1037
          %v1039 = vadd.f32 %v1003, %v1037
          %v1040 = vadd.f32 %v1004, %v1037
          %v1041 = vadd.f32 %v1005, %v1037
          %v1042 = vadd.f32 %v1006, %v1037
          %v1043 = vadd.f32 %v1007, %v1037
          %v1044 = vadd.f32 %v1008, %v1037
          %v1045 = vadd.f32 %v1009, %v1037
          %v1046 = vadd.f32 %v1010, %v1037
          %v1047 = vadd.f32 %v1011, %v1037
          %v1048 = vadd.f32 %v1012, %v1037
          %v1049 = vadd.f32 %v1013, %v1037
          %v1050 = vadd.f32 %v1014, %v1037
          %v1051 = vadd.f32 %v1015, %v1037
          %v1052 = vadd.f32 %v1016, %v1037
          %v1053 = vadd.f32 %v1017, %v1037
          %v1054 = vadd.f32 %v1018, %v1037
          %v1055 = vadd.f32 %v1019, %v1037
          %v1056 = vadd.f32 %v1020, %v1037
          %v1057 = vadd.f32 %v1021, %v1037
          %v1058 = vadd.f32 %v1022, %v1037
          %v1059 = vadd.f32 %v1023, %v1037
          %v1060 = vadd.f32 %v1024, %v1037
          %v1061 = vadd.f32 %v1025, %v1037
          %v1062 = vadd.f32 %v1026, %v1037
          %v1063 = vadd.f32 %v1027, %v1037
          %v1064 = vadd.f32 %v1028, %v1037
          %v1065 = vadd.f32 %v1029, %v1037
          %v1066 = vadd.f32 %v1030, %v1037
          %v1067 = vadd.f32 %v1031, %v1037
          %v1068 = vadd.f32 %v1032, %v1037
          %v1069 = vadd.f32 %v1033, %v1037
          %v1070 = vmax.f32 %v1038, 0.0
          %v1071 = vmax.f32 %v1039, 0.0
          %v1072 = vmax.f32 %v1040, 0.0
          %v1073 = vmax.f32 %v1041, 0.0
          %v1074 = vmax.f32 %v1042, 0.0
          %v1075 = vmax.f32 %v1043, 0.0
          %v1076 = vmax.f32 %v1044, 0.0
          %v1077 = vmax.f32 %v1045, 0.0
          %v1078 = vmax.f32 %v1046, 0.0
          %v1079 = vmax.f32 %v1047, 0.0
          %v1080 = vmax.f32 %v1048, 0.0
          %v1081 = vmax.f32 %v1049, 0.0
          %v1082 = vmax.f32 %v1050, 0.0
          %v1083 = vmax.f32 %v1051, 0.0
          %v1084 = vmax.f32 %v1052, 0.0
          %v1085 = vmax.f32 %v1053, 0.0
          %v1086 = vmax.f32 %v1054, 0.0
          %v1087 = vmax.f32 %v1055, 0.0
          %v1088 = vmax.f32 %v1056, 0.0
          %v1089 = vmax.f32 %v1057, 0.0
          %v1090 = vmax.f32 %v1058, 0.0
          %v1091 = vmax.f32 %v1059, 0.0
          %v1092 = vmax.f32 %v1060, 0.0
          %v1093 = vmax.f32 %v1061, 0.0
          %v1094 = vmax.f32 %v1062, 0.0
          %v1095 = vmax.f32 %v1063, 0.0
          %v1096 = vmax.f32 %v1064, 0.0
          %v1097 = vmax.f32 %v1065, 0.0
          %v1098 = vmax.f32 %v1066, 0.0
          %v1099 = vmax.f32 %v1067, 0.0
          %v1100 = vmax.f32 %v1068, 0.0
          %v1101 = vmax.f32 %v1069, 0.0
          %v1102 = vld [vmem:[#allocation11] sm:$0xf]
          %v1104 = vsel %vm458, %v1070, 0
          %v1107 = vsel %vm458, %v1071, 0
          %v1110 = vsel %vm458, %v1072, 0
          %v1113 = vsel %vm458, %v1073, 0
          %v1116 = vsel %vm458, %v1074, 0
          %v1119 = vsel %vm458, %v1075, 0
          %v1122 = vsel %vm458, %v1076, 0
          %v1125 = vsel %vm458, %v1077, 0
          %v1128 = vsel %vm458, %v1078, 0
          %v1131 = vsel %vm458, %v1079, 0
          %v1134 = vsel %vm458, %v1080, 0
          %v1137 = vsel %vm458, %v1081, 0
          %v1140 = vsel %vm458, %v1082, 0
          %v1143 = vsel %vm458, %v1083, 0
          %v1146 = vsel %vm458, %v1084, 0
          %v1149 = vsel %vm458, %v1085, 0
          %v1152 = vsel %vm458, %v1086, 0
          %v1155 = vsel %vm458, %v1087, 0
          %v1158 = vsel %vm458, %v1088, 0
          %v1161 = vsel %vm458, %v1089, 0
          %v1164 = vsel %vm458, %v1090, 0
          %v1167 = vsel %vm458, %v1091, 0
          %v1170 = vsel %vm458, %v1092, 0
          %v1173 = vsel %vm458, %v1093, 0
          %v1176 = vsel %vm458, %v1094, 0
          %v1179 = vsel %vm458, %v1095, 0
          %v1182 = vsel %vm458, %v1096, 0
          %v1185 = vsel %vm458, %v1097, 0
          %v1188 = vsel %vm458, %v1098, 0
          %v1191 = vsel %vm458, %v1099, 0
          %v1194 = vsel %vm458, %v1100, 0
          %v1197 = vsel %vm458, %v1101, 0
          %v1200 = vsel %vm555, %v1102, 0
          %1202 = vmatprep.subr.mxu0 0.0
          %1203 = vmatpush1.msra.mxu0 %v1200
          %1204 = vmatprep.subr.mxu0 0.0
          %1205 = vmatpush1.msra.mxu0 0.0
          %1206 = vmatprep.subr.mxu0 0.0
          %1207 = vmatpush1.msra.mxu0 0.0
          %1208 = vmatprep.subr.mxu0 0.0
          %1209 = vmatpush1.msra.mxu0 0.0
          %1210 = vmatprep.subr.mxu0 0.0
          %1211 = vmatpush1.msra.mxu0 0.0
          %1212 = vmatprep.subr.mxu0 0.0
          %1213 = vmatpush1.msra.mxu0 0.0
          %1214 = vmatprep.subr.mxu0 0.0
          %1215 = vmatpush1.msra.mxu0 0.0
          %1216 = vmatprep.subr.mxu0 0.0
          %1217 = vmatpush1.msra.mxu0 0.0
          %1218 = vmatprep.subr.mxu0 0.0
          %1219 = vmatpush1.msra.mxu0 0.0
          %1220 = vmatprep.subr.mxu0 0.0
          %1221 = vmatpush1.msra.mxu0 0.0
          %1222 = vmatprep.subr.mxu0 0.0
          %1223 = vmatpush1.msra.mxu0 0.0
          %1224 = vmatprep.subr.mxu0 0.0
          %1225 = vmatpush1.msra.mxu0 0.0
          %1226 = vmatprep.subr.mxu0 0.0
          %1227 = vmatpush1.msra.mxu0 0.0
          %1228 = vmatprep.subr.mxu0 0.0
          %1229 = vmatpush1.msra.mxu0 0.0
          %1230 = vmatprep.subr.mxu0 0.0
          %1231 = vmatpush1.msra.mxu0 0.0
          %1232 = vmatprep.subr.mxu0 0.0
          %1233 = vmatpush1.msra.mxu0 0.0
          %1234 = vmatprep.subr.mxu0 0.0
          %1235 = vmatpush1.msra.mxu0 0.0
          %1236 = vmatprep.subr.mxu0 0.0
          %1237 = vmatpush1.msra.mxu0 0.0
          %1238 = vmatprep.subr.mxu0 0.0
          %1239 = vmatpush1.msra.mxu0 0.0
          %1240 = vmatprep.subr.mxu0 0.0
          %1241 = vmatpush1.msra.mxu0 0.0
          %1242 = vmatprep.subr.mxu0 0.0
          %1243 = vmatpush1.msra.mxu0 0.0
          %1244 = vmatprep.subr.mxu0 0.0
          %1245 = vmatpush1.msra.mxu0 0.0
          %1246 = vmatprep.subr.mxu0 0.0
          %1247 = vmatpush1.msra.mxu0 0.0
          %1248 = vmatprep.subr.mxu0 0.0
          %1249 = vmatpush1.msra.mxu0 0.0
          %1250 = vmatprep.subr.mxu0 0.0
          %1251 = vmatpush1.msra.mxu0 0.0
          %1252 = vmatprep.subr.mxu0 0.0
          %1253 = vmatpush1.msra.mxu0 0.0
          %1254 = vmatprep.subr.mxu0 0.0
          %1255 = vmatpush1.msra.mxu0 0.0
          %1256 = vmatprep.subr.mxu0 0.0
          %1257 = vmatpush1.msra.mxu0 0.0
          %1258 = vmatprep.subr.mxu0 0.0
          %1259 = vmatpush1.msra.mxu0 0.0
          %1260 = vmatprep.subr.mxu0 0.0
          %1261 = vmatpush1.msra.mxu0 0.0
          %1262 = vmatprep.subr.mxu0 0.0
          %1263 = vmatpush1.msra.mxu0 0.0
          %1264 = vmatprep.subr.mxu0 0.0
          %1265 = vmatpush1.msra.mxu0 0.0
          %1266 = vmatprep.mubr.f32.mxu0 0.0
          %1267 = vmatmul.mubr.f32.gmra.mrb[0].mxu0 %v1104
          %v1268 = vpop.f32.mrb[0].mxu0
          %v1269 = vadd.f32 0.0, %v1268
          %v1270 = vpop.f32.mrb[0].mxu0
          %1271 = vmatprep.mubr.f32.mxu0 0.0
          %1272 = vmatmul.mubr.f32.gmra.mrb[0].mxu0 %v1107
          %v1273 = vpop.f32.mrb[0].mxu0
          %v1274 = vadd.f32 0.0, %v1273
          %v1275 = vpop.f32.mrb[0].mxu0
          %1276 = vmatprep.mubr.f32.mxu0 0.0
          %1277 = vmatmul.mubr.f32.gmra.mrb[0].mxu0 %v1110
          %v1278 = vpop.f32.mrb[0].mxu0
          %v1279 = vadd.f32 0.0, %v1278
          %v1280 = vpop.f32.mrb[0].mxu0
          %1281 = vmatprep.mubr.f32.mxu0 0.0
          %1282 = vmatmul.mubr.f32.gmra.mrb[0].mxu0 %v1113
          %v1283 = vpop.f32.mrb[0].mxu0
          %v1284 = vadd.f32 0.0, %v1283
          %v1285 = vpop.f32.mrb[0].mxu0
          %1286 = vmatprep.mubr.f32.mxu0 0.0
          %1287 = vmatmul.mubr.f32.gmra.mrb[0].mxu0 %v1116
          %v1288 = vpop.f32.mrb[0].mxu0
          %v1289 = vadd.f32 0.0, %v1288
          %v1290 = vpop.f32.mrb[0].mxu0
          %1291 = vmatprep.mubr.f32.mxu0 0.0
          %1292 = vmatmul.mubr.f32.gmra.mrb[0].mxu0 %v1119
          %v1293 = vpop.f32.mrb[0].mxu0
          %v1294 = vadd.f32 0.0, %v1293
          %v1295 = vpop.f32.mrb[0].mxu0
          %1296 = vmatprep.mubr.f32.mxu0 0.0
          %1297 = vmatmul.mubr.f32.gmra.mrb[0].mxu0 %v1122
          %v1298 = vpop.f32.mrb[0].mxu0
          %v1299 = vadd.f32 0.0, %v1298
          %v1300 = vpop.f32.mrb[0].mxu0
          %1301 = vmatprep.mubr.f32.mxu0 0.0
          %1302 = vmatmul.mubr.f32.gmra.mrb[0].mxu0 %v1125
          %v1303 = vpop.f32.mrb[0].mxu0
          %v1304 = vadd.f32 0.0, %v1303
          %v1305 = vpop.f32.mrb[0].mxu0
          %1306 = vmatprep.mubr.f32.mxu0 0.0
          %1307 = vmatmul.mubr.f32.gmra.mrb[0].mxu0 %v1128
          %v1308 = vpop.f32.mrb[0].mxu0
          %v1309 = vadd.f32 0.0, %v1308
          %v1310 = vpop.f32.mrb[0].mxu0
          %1311 = vmatprep.mubr.f32.mxu0 0.0
          %1312 = vmatmul.mubr.f32.gmra.mrb[0].mxu0 %v1131
          %v1313 = vpop.f32.mrb[0].mxu0
          %v1314 = vadd.f32 0.0, %v1313
          %v1315 = vpop.f32.mrb[0].mxu0
          %1316 = vmatprep.mubr.f32.mxu0 0.0
          %1317 = vmatmul.mubr.f32.gmra.mrb[0].mxu0 %v1134
          %v1318 = vpop.f32.mrb[0].mxu0
          %v1319 = vadd.f32 0.0, %v1318
          %v1320 = vpop.f32.mrb[0].mxu0
          %1321 = vmatprep.mubr.f32.mxu0 0.0
          %1322 = vmatmul.mubr.f32.gmra.mrb[0].mxu0 %v1137
          %v1323 = vpop.f32.mrb[0].mxu0
          %v1324 = vadd.f32 0.0, %v1323
          %v1325 = vpop.f32.mrb[0].mxu0
          %1326 = vmatprep.mubr.f32.mxu0 0.0
          %1327 = vmatmul.mubr.f32.gmra.mrb[0].mxu0 %v1140
          %v1328 = vpop.f32.mrb[0].mxu0
          %v1329 = vadd.f32 0.0, %v1328
          %v1330 = vpop.f32.mrb[0].mxu0
          %1331 = vmatprep.mubr.f32.mxu0 0.0
          %1332 = vmatmul.mubr.f32.gmra.mrb[0].mxu0 %v1143
          %v1333 = vpop.f32.mrb[0].mxu0
          %v1334 = vadd.f32 0.0, %v1333
          %v1335 = vpop.f32.mrb[0].mxu0
          %1336 = vmatprep.mubr.f32.mxu0 0.0
          %1337 = vmatmul.mubr.f32.gmra.mrb[0].mxu0 %v1146
          %v1338 = vpop.f32.mrb[0].mxu0
          %v1339 = vadd.f32 0.0, %v1338
          %v1340 = vpop.f32.mrb[0].mxu0
          %1341 = vmatprep.mubr.f32.mxu0 0.0
          %1342 = vmatmul.mubr.f32.gmra.mrb[0].mxu0 %v1149
          %v1343 = vpop.f32.mrb[0].mxu0
          %v1344 = vadd.f32 0.0, %v1343
          %v1345 = vpop.f32.mrb[0].mxu0
          %1346 = vmatprep.mubr.f32.mxu0 0.0
          %1347 = vmatmul.mubr.f32.gmra.mrb[0].mxu0 %v1152
          %v1348 = vpop.f32.mrb[0].mxu0
          %v1349 = vadd.f32 0.0, %v1348
          %v1350 = vpop.f32.mrb[0].mxu0
          %1351 = vmatprep.mubr.f32.mxu0 0.0
          %1352 = vmatmul.mubr.f32.gmra.mrb[0].mxu0 %v1155
          %v1353 = vpop.f32.mrb[0].mxu0
          %v1354 = vadd.f32 0.0, %v1353
          %v1355 = vpop.f32.mrb[0].mxu0
          %1356 = vmatprep.mubr.f32.mxu0 0.0
          %1357 = vmatmul.mubr.f32.gmra.mrb[0].mxu0 %v1158
          %v1358 = vpop.f32.mrb[0].mxu0
          %v1359 = vadd.f32 0.0, %v1358
          %v1360 = vpop.f32.mrb[0].mxu0
          %1361 = vmatprep.mubr.f32.mxu0 0.0
          %1362 = vmatmul.mubr.f32.gmra.mrb[0].mxu0 %v1161
          %v1363 = vpop.f32.mrb[0].mxu0
          %v1364 = vadd.f32 0.0, %v1363
          %v1365 = vpop.f32.mrb[0].mxu0
          %1366 = vmatprep.mubr.f32.mxu0 0.0
          %1367 = vmatmul.mubr.f32.gmra.mrb[0].mxu0 %v1164
          %v1368 = vpop.f32.mrb[0].mxu0
          %v1369 = vadd.f32 0.0, %v1368
          %v1370 = vpop.f32.mrb[0].mxu0
          %1371 = vmatprep.mubr.f32.mxu0 0.0
          %1372 = vmatmul.mubr.f32.gmra.mrb[0].mxu0 %v1167
          %v1373 = vpop.f32.mrb[0].mxu0
          %v1374 = vadd.f32 0.0, %v1373
          %v1375 = vpop.f32.mrb[0].mxu0
          %1376 = vmatprep.mubr.f32.mxu0 0.0
          %1377 = vmatmul.mubr.f32.gmra.mrb[0].mxu0 %v1170
          %v1378 = vpop.f32.mrb[0].mxu0
          %v1379 = vadd.f32 0.0, %v1378
          %v1380 = vpop.f32.mrb[0].mxu0
          %1381 = vmatprep.mubr.f32.mxu0 0.0
          %1382 = vmatmul.mubr.f32.gmra.mrb[0].mxu0 %v1173
          %v1383 = vpop.f32.mrb[0].mxu0
          %v1384 = vadd.f32 0.0, %v1383
          %v1385 = vpop.f32.mrb[0].mxu0
          %1386 = vmatprep.mubr.f32.mxu0 0.0
          %1387 = vmatmul.mubr.f32.gmra.mrb[0].mxu0 %v1176
          %v1388 = vpop.f32.mrb[0].mxu0
          %v1389 = vadd.f32 0.0, %v1388
          %v1390 = vpop.f32.mrb[0].mxu0
          %1391 = vmatprep.mubr.f32.mxu0 0.0
          %1392 = vmatmul.mubr.f32.gmra.mrb[0].mxu0 %v1179
          %v1393 = vpop.f32.mrb[0].mxu0
          %v1394 = vadd.f32 0.0, %v1393
          %v1395 = vpop.f32.mrb[0].mxu0
          %1396 = vmatprep.mubr.f32.mxu0 0.0
          %1397 = vmatmul.mubr.f32.gmra.mrb[0].mxu0 %v1182
          %v1398 = vpop.f32.mrb[0].mxu0
          %v1399 = vadd.f32 0.0, %v1398
          %v1400 = vpop.f32.mrb[0].mxu0
          %1401 = vmatprep.mubr.f32.mxu0 0.0
          %1402 = vmatmul.mubr.f32.gmra.mrb[0].mxu0 %v1185
          %v1403 = vpop.f32.mrb[0].mxu0
          %v1404 = vadd.f32 0.0, %v1403
          %v1405 = vpop.f32.mrb[0].mxu0
          %1406 = vmatprep.mubr.f32.mxu0 0.0
          %1407 = vmatmul.mubr.f32.gmra.mrb[0].mxu0 %v1188
          %v1408 = vpop.f32.mrb[0].mxu0
          %v1409 = vadd.f32 0.0, %v1408
          %v1410 = vpop.f32.mrb[0].mxu0
          %1411 = vmatprep.mubr.f32.mxu0 0.0
          %1412 = vmatmul.mubr.f32.gmra.mrb[0].mxu0 %v1191
          %v1413 = vpop.f32.mrb[0].mxu0
          %v1414 = vadd.f32 0.0, %v1413
          %v1415 = vpop.f32.mrb[0].mxu0
          %1416 = vmatprep.mubr.f32.mxu0 0.0
          %1417 = vmatmul.mubr.f32.gmra.mrb[0].mxu0 %v1194
          %v1418 = vpop.f32.mrb[0].mxu0
          %v1419 = vadd.f32 0.0, %v1418
          %v1420 = vpop.f32.mrb[0].mxu0
          %1421 = vmatprep.mubr.f32.mxu0 0.0
          %1422 = vmatmul.mubr.f32.gmra.mrb[0].mxu0 %v1197
          %v1423 = vpop.f32.mrb[0].mxu0
          %v1424 = vadd.f32 0.0, %v1423
          %v1425 = vpop.f32.mrb[0].mxu0
          %1426 = vdwg.mxu0
          %v1427 = vld [vmem:[#allocation4] sm:$0x1]
          %vm1428 = vcmask 72704
          %v1429 = vsel %vm1428, %v1269, 0.0
          %v1430 = vsel %vm1428, %v1274, 0.0
          %v1431 = vadd.f32 %v1429, %v1430
          %v1432 = vsel %vm1428, %v1279, 0.0
          %v1433 = vadd.f32 %v1431, %v1432
          %v1434 = vsel %vm1428, %v1284, 0.0
          %v1435 = vadd.f32 %v1433, %v1434
          %v1436 = vsel %vm1428, %v1289, 0.0
          %v1437 = vadd.f32 %v1435, %v1436
          %v1438 = vsel %vm1428, %v1294, 0.0
          %v1439 = vadd.f32 %v1437, %v1438
          %v1440 = vsel %vm1428, %v1299, 0.0
          %v1441 = vadd.f32 %v1439, %v1440
          %v1442 = vsel %vm1428, %v1304, 0.0
          %v1443 = vadd.f32 %v1441, %v1442
          %v1444 = vsel %vm1428, %v1309, 0.0
          %v1445 = vadd.f32 %v1443, %v1444
          %v1446 = vsel %vm1428, %v1314, 0.0
          %v1447 = vadd.f32 %v1445, %v1446
          %v1448 = vsel %vm1428, %v1319, 0.0
          %v1449 = vadd.f32 %v1447, %v1448
          %v1450 = vsel %vm1428, %v1324, 0.0
          %v1451 = vadd.f32 %v1449, %v1450
          %v1452 = vsel %vm1428, %v1329, 0.0
          %v1453 = vadd.f32 %v1451, %v1452
          %v1454 = vsel %vm1428, %v1334, 0.0
          %v1455 = vadd.f32 %v1453, %v1454
          %v1456 = vsel %vm1428, %v1339, 0.0
          %v1457 = vadd.f32 %v1455, %v1456
          %v1458 = vsel %vm1428, %v1344, 0.0
          %v1459 = vadd.f32 %v1457, %v1458
          %v1460 = vsel %vm1428, %v1349, 0.0
          %v1461 = vadd.f32 %v1459, %v1460
          %v1462 = vsel %vm1428, %v1354, 0.0
          %v1463 = vadd.f32 %v1461, %v1462
          %v1464 = vsel %vm1428, %v1359, 0.0
          %v1465 = vadd.f32 %v1463, %v1464
          %v1466 = vsel %vm1428, %v1364, 0.0
          %v1467 = vadd.f32 %v1465, %v1466
          %v1468 = vsel %vm1428, %v1369, 0.0
          %v1469 = vadd.f32 %v1467, %v1468
          %v1470 = vsel %vm1428, %v1374, 0.0
          %v1471 = vadd.f32 %v1469, %v1470
          %v1472 = vsel %vm1428, %v1379, 0.0
          %v1473 = vadd.f32 %v1471, %v1472
          %v1474 = vsel %vm1428, %v1384, 0.0
          %v1475 = vadd.f32 %v1473, %v1474
          %v1476 = vsel %vm1428, %v1389, 0.0
          %v1477 = vadd.f32 %v1475, %v1476
          %v1478 = vsel %vm1428, %v1394, 0.0
          %v1479 = vadd.f32 %v1477, %v1478
          %v1480 = vsel %vm1428, %v1399, 0.0
          %v1481 = vadd.f32 %v1479, %v1480
          %v1482 = vsel %vm1428, %v1404, 0.0
          %v1483 = vadd.f32 %v1481, %v1482
          %v1484 = vsel %vm1428, %v1409, 0.0
          %v1485 = vadd.f32 %v1483, %v1484
          %v1486 = vsel %vm1428, %v1414, 0.0
          %v1487 = vadd.f32 %v1485, %v1486
          %v1488 = vsel %vm1428, %v1419, 0.0
          %v1489 = vadd.f32 %v1487, %v1488
          %v1490 = vsel %vm1428, %v1424, 0.0
          %v1491 = vadd.f32 %v1489, %v1490
          %v1492 = vrot.slane %v1491, 4
          %v1493 = vadd.f32 %v1491, %v1492
          %v1494 = vrot.slane %v1493, 2
          %v1495 = vadd.f32 %v1493, %v1494
          %v1496 = vrot.slane %v1495, 1
          %v1497 = vadd.f32 %v1495, %v1496
          %v1498 = vadd.f32 %v1427, %v1497
          %vm1499 = vcmask 65536
          %1500 = vst.msk [vmem:[#allocation4] sm:$0x1] %vm1499, %v1498
          %v1501 = vld [vmem:[#allocation5] sm:$0x1]
          %v1502 = vmul.f32 %v1269, %v1269
          %v1503 = vmul.f32 %v1274, %v1274
          %v1504 = vmul.f32 %v1279, %v1279
          %v1505 = vmul.f32 %v1284, %v1284
          %v1506 = vmul.f32 %v1289, %v1289
          %v1507 = vmul.f32 %v1294, %v1294
          %v1508 = vmul.f32 %v1299, %v1299
          %v1509 = vmul.f32 %v1304, %v1304
          %v1510 = vmul.f32 %v1309, %v1309
          %v1511 = vmul.f32 %v1314, %v1314
          %v1512 = vmul.f32 %v1319, %v1319
          %v1513 = vmul.f32 %v1324, %v1324
          %v1514 = vmul.f32 %v1329, %v1329
          %v1515 = vmul.f32 %v1334, %v1334
          %v1516 = vmul.f32 %v1339, %v1339
          %v1517 = vmul.f32 %v1344, %v1344
          %v1518 = vmul.f32 %v1349, %v1349
          %v1519 = vmul.f32 %v1354, %v1354
          %v1520 = vmul.f32 %v1359, %v1359
          %v1521 = vmul.f32 %v1364, %v1364
          %v1522 = vmul.f32 %v1369, %v1369
          %v1523 = vmul.f32 %v1374, %v1374
          %v1524 = vmul.f32 %v1379, %v1379
          %v1525 = vmul.f32 %v1384, %v1384
          %v1526 = vmul.f32 %v1389, %v1389
          %v1527 = vmul.f32 %v1394, %v1394
          %v1528 = vmul.f32 %v1399, %v1399
          %v1529 = vmul.f32 %v1404, %v1404
          %v1530 = vmul.f32 %v1409, %v1409
          %v1531 = vmul.f32 %v1414, %v1414
          %v1532 = vmul.f32 %v1419, %v1419
          %v1533 = vmul.f32 %v1424, %v1424
          %v1534 = vsel %vm1428, %v1502, 0.0
          %v1535 = vsel %vm1428, %v1503, 0.0
          %v1536 = vadd.f32 %v1534, %v1535
          %v1537 = vsel %vm1428, %v1504, 0.0
          %v1538 = vadd.f32 %v1536, %v1537
          %v1539 = vsel %vm1428, %v1505, 0.0
          %v1540 = vadd.f32 %v1538, %v1539
          %v1541 = vsel %vm1428, %v1506, 0.0
          %v1542 = vadd.f32 %v1540, %v1541
          %v1543 = vsel %vm1428, %v1507, 0.0
          %v1544 = vadd.f32 %v1542, %v1543
          %v1545 = vsel %vm1428, %v1508, 0.0
          %v1546 = vadd.f32 %v1544, %v1545
          %v1547 = vsel %vm1428, %v1509, 0.0
          %v1548 = vadd.f32 %v1546, %v1547
          %v1549 = vsel %vm1428, %v1510, 0.0
          %v1550 = vadd.f32 %v1548, %v1549
          %v1551 = vsel %vm1428, %v1511, 0.0
          %v1552 = vadd.f32 %v1550, %v1551
          %v1553 = vsel %vm1428, %v1512, 0.0
          %v1554 = vadd.f32 %v1552, %v1553
          %v1555 = vsel %vm1428, %v1513, 0.0
          %v1556 = vadd.f32 %v1554, %v1555
          %v1557 = vsel %vm1428, %v1514, 0.0
          %v1558 = vadd.f32 %v1556, %v1557
          %v1559 = vsel %vm1428, %v1515, 0.0
          %v1560 = vadd.f32 %v1558, %v1559
          %v1561 = vsel %vm1428, %v1516, 0.0
          %v1562 = vadd.f32 %v1560, %v1561
          %v1563 = vsel %vm1428, %v1517, 0.0
          %v1564 = vadd.f32 %v1562, %v1563
          %v1565 = vsel %vm1428, %v1518, 0.0
          %v1566 = vadd.f32 %v1564, %v1565
          %v1567 = vsel %vm1428, %v1519, 0.0
          %v1568 = vadd.f32 %v1566, %v1567
          %v1569 = vsel %vm1428, %v1520, 0.0
          %v1570 = vadd.f32 %v1568, %v1569
          %v1571 = vsel %vm1428, %v1521, 0.0
          %v1572 = vadd.f32 %v1570, %v1571
          %v1573 = vsel %vm1428, %v1522, 0.0
          %v1574 = vadd.f32 %v1572, %v1573
          %v1575 = vsel %vm1428, %v1523, 0.0
          %v1576 = vadd.f32 %v1574, %v1575
          %v1577 = vsel %vm1428, %v1524, 0.0
          %v1578 = vadd.f32 %v1576, %v1577
          %v1579 = vsel %vm1428, %v1525, 0.0
          %v1580 = vadd.f32 %v1578, %v1579
          %v1581 = vsel %vm1428, %v1526, 0.0
          %v1582 = vadd.f32 %v1580, %v1581
          %v1583 = vsel %vm1428, %v1527, 0.0
          %v1584 = vadd.f32 %v1582, %v1583
          %v1585 = vsel %vm1428, %v1528, 0.0
          %v1586 = vadd.f32 %v1584, %v1585
          %v1587 = vsel %vm1428, %v1529, 0.0
          %v1588 = vadd.f32 %v1586, %v1587
          %v1589 = vsel %vm1428, %v1530, 0.0
          %v1590 = vadd.f32 %v1588, %v1589
          %v1591 = vsel %vm1428, %v1531, 0.0
          %v1592 = vadd.f32 %v1590, %v1591
          %v1593 = vsel %vm1428, %v1532, 0.0
          %v1594 = vadd.f32 %v1592, %v1593
          %v1595 = vsel %vm1428, %v1533, 0.0
          %v1596 = vadd.f32 %v1594, %v1595
          %v1597 = vrot.slane %v1596, 4
          %v1598 = vadd.f32 %v1596, %v1597
          %v1599 = vrot.slane %v1598, 2
          %v1600 = vadd.f32 %v1598, %v1599
          %v1601 = vrot.slane %v1600, 1
          %v1602 = vadd.f32 %v1600, %v1601
          %v1603 = vadd.f32 %v1501, %v1602
          %1604 = vst.msk [vmem:[#allocation5] sm:$0x1] %vm1499, %v1603
        $region92: #{tpu_custom_call.1} parent=47 // pred_fallthru
          _
        %p1605 = scmp.eq.s32.totalorder %s36, 2
        // Predicated region
        $region93: #{tpu_custom_call.1} parent=47 // pred_check
          %p1606 = pneg %p1605
        $region94: #{tpu_custom_call.1} parent=47 // pred_check_branch
          %1608 = sbr.rel (%p1606) target = $region96
        $region95: #{tpu_custom_call.1} parent=47 // pred_region
          %v1609 = vld [vmem:[#allocation2] sm:$0x1]
          %v1610 = vmul.f32 %v1609, 0.001953125
          %v1611 = vld [vmem:[#allocation3] sm:$0x1]
          %v1612 = vmul.f32 %v1611, 0.001953125
          %v1613 = vmul.f32 %v1610, %v1610
          %v1614 = vsub.f32 %v1612, %v1613
          %v1615 = vmax.f32 %v1614, 0.0
          %v1616 = vld [vmem:[#allocation14] sm:$0x1]
          %v1617 = vadd.f32 %v1615, 1e-05
          %v1618 = vrsqrt.pop %v1617
          %v1619 = vmul.f32 %v1616, %v1618
          %v1620 = vld [vmem:[#allocation14 + $0x1] sm:$0x1]
          %v1621 = vmul.f32 %v1610, %v1619
          %v1622 = vsub.f32 %v1620, %v1621
          %v1623 = vlaneseq
          %v1624 = vshrl.u32 %v1623, 7
          %v1625 = vsub.s32 0, %v1624
          %v1626 = vrot.slane %v1619, %v1625
          %v1627 = vmul.f32 %v626, %v1626
          %v1628 = vmul.f32 %v631, %v1626
          %v1629 = vmul.f32 %v636, %v1626
          %v1630 = vmul.f32 %v641, %v1626
          %v1631 = vmul.f32 %v646, %v1626
          %v1632 = vmul.f32 %v651, %v1626
          %v1633 = vmul.f32 %v656, %v1626
          %v1634 = vmul.f32 %v661, %v1626
          %v1635 = vmul.f32 %v666, %v1626
          %v1636 = vmul.f32 %v671, %v1626
          %v1637 = vmul.f32 %v676, %v1626
          %v1638 = vmul.f32 %v681, %v1626
          %v1639 = vmul.f32 %v686, %v1626
          %v1640 = vmul.f32 %v691, %v1626
          %v1641 = vmul.f32 %v696, %v1626
          %v1642 = vmul.f32 %v701, %v1626
          %v1643 = vmul.f32 %v706, %v1626
          %v1644 = vmul.f32 %v711, %v1626
          %v1645 = vmul.f32 %v716, %v1626
          %v1646 = vmul.f32 %v721, %v1626
          %v1647 = vmul.f32 %v726, %v1626
          %v1648 = vmul.f32 %v731, %v1626
          %v1649 = vmul.f32 %v736, %v1626
          %v1650 = vmul.f32 %v741, %v1626
          %v1651 = vmul.f32 %v746, %v1626
          %v1652 = vmul.f32 %v751, %v1626
          %v1653 = vmul.f32 %v756, %v1626
          %v1654 = vmul.f32 %v761, %v1626
          %v1655 = vmul.f32 %v766, %v1626
          %v1656 = vmul.f32 %v771, %v1626
          %v1657 = vmul.f32 %v776, %v1626
          %v1658 = vmul.f32 %v781, %v1626
          %v1659 = vlaneseq
          %v1660 = vshrl.u32 %v1659, 7
          %v1661 = vsub.s32 0, %v1660
          %v1662 = vrot.slane %v1622, %v1661
          %v1663 = vadd.f32 %v1627, %v1662
          %v1664 = vadd.f32 %v1628, %v1662
          %v1665 = vadd.f32 %v1629, %v1662
          %v1666 = vadd.f32 %v1630, %v1662
          %v1667 = vadd.f32 %v1631, %v1662
          %v1668 = vadd.f32 %v1632, %v1662
          %v1669 = vadd.f32 %v1633, %v1662
          %v1670 = vadd.f32 %v1634, %v1662
          %v1671 = vadd.f32 %v1635, %v1662
          %v1672 = vadd.f32 %v1636, %v1662
          %v1673 = vadd.f32 %v1637, %v1662
          %v1674 = vadd.f32 %v1638, %v1662
          %v1675 = vadd.f32 %v1639, %v1662
          %v1676 = vadd.f32 %v1640, %v1662
          %v1677 = vadd.f32 %v1641, %v1662
          %v1678 = vadd.f32 %v1642, %v1662
          %v1679 = vadd.f32 %v1643, %v1662
          %v1680 = vadd.f32 %v1644, %v1662
          %v1681 = vadd.f32 %v1645, %v1662
          %v1682 = vadd.f32 %v1646, %v1662
          %v1683 = vadd.f32 %v1647, %v1662
          %v1684 = vadd.f32 %v1648, %v1662
          %v1685 = vadd.f32 %v1649, %v1662
          %v1686 = vadd.f32 %v1650, %v1662
          %v1687 = vadd.f32 %v1651, %v1662
          %v1688 = vadd.f32 %v1652, %v1662
          %v1689 = vadd.f32 %v1653, %v1662
          %v1690 = vadd.f32 %v1654, %v1662
          %v1691 = vadd.f32 %v1655, %v1662
          %v1692 = vadd.f32 %v1656, %v1662
          %v1693 = vadd.f32 %v1657, %v1662
          %v1694 = vadd.f32 %v1658, %v1662
          %v1695 = vmax.f32 %v1663, 0.0
          %v1696 = vmax.f32 %v1664, 0.0
          %v1697 = vmax.f32 %v1665, 0.0
          %v1698 = vmax.f32 %v1666, 0.0
          %v1699 = vmax.f32 %v1667, 0.0
          %v1700 = vmax.f32 %v1668, 0.0
          %v1701 = vmax.f32 %v1669, 0.0
          %v1702 = vmax.f32 %v1670, 0.0
          %v1703 = vmax.f32 %v1671, 0.0
          %v1704 = vmax.f32 %v1672, 0.0
          %v1705 = vmax.f32 %v1673, 0.0
          %v1706 = vmax.f32 %v1674, 0.0
          %v1707 = vmax.f32 %v1675, 0.0
          %v1708 = vmax.f32 %v1676, 0.0
          %v1709 = vmax.f32 %v1677, 0.0
          %v1710 = vmax.f32 %v1678, 0.0
          %v1711 = vmax.f32 %v1679, 0.0
          %v1712 = vmax.f32 %v1680, 0.0
          %v1713 = vmax.f32 %v1681, 0.0
          %v1714 = vmax.f32 %v1682, 0.0
          %v1715 = vmax.f32 %v1683, 0.0
          %v1716 = vmax.f32 %v1684, 0.0
          %v1717 = vmax.f32 %v1685, 0.0
          %v1718 = vmax.f32 %v1686, 0.0
          %v1719 = vmax.f32 %v1687, 0.0
          %v1720 = vmax.f32 %v1688, 0.0
          %v1721 = vmax.f32 %v1689, 0.0
          %v1722 = vmax.f32 %v1690, 0.0
          %v1723 = vmax.f32 %v1691, 0.0
          %v1724 = vmax.f32 %v1692, 0.0
          %v1725 = vmax.f32 %v1693, 0.0
          %v1726 = vmax.f32 %v1694, 0.0
          %v1727 = vld [vmem:[#allocation11] sm:$0xf]
          %v1729 = vsel %vm458, %v1695, 0
          %v1732 = vsel %vm458, %v1696, 0
          %v1735 = vsel %vm458, %v1697, 0
          %v1738 = vsel %vm458, %v1698, 0
          %v1741 = vsel %vm458, %v1699, 0
          %v1744 = vsel %vm458, %v1700, 0
          %v1747 = vsel %vm458, %v1701, 0
          %v1750 = vsel %vm458, %v1702, 0
          %v1753 = vsel %vm458, %v1703, 0
          %v1756 = vsel %vm458, %v1704, 0
          %v1759 = vsel %vm458, %v1705, 0
          %v1762 = vsel %vm458, %v1706, 0
          %v1765 = vsel %vm458, %v1707, 0
          %v1768 = vsel %vm458, %v1708, 0
          %v1771 = vsel %vm458, %v1709, 0
          %v1774 = vsel %vm458, %v1710, 0
          %v1777 = vsel %vm458, %v1711, 0
          %v1780 = vsel %vm458, %v1712, 0
          %v1783 = vsel %vm458, %v1713, 0
          %v1786 = vsel %vm458, %v1714, 0
          %v1789 = vsel %vm458, %v1715, 0
          %v1792 = vsel %vm458, %v1716, 0
          %v1795 = vsel %vm458, %v1717, 0
          %v1798 = vsel %vm458, %v1718, 0
          %v1801 = vsel %vm458, %v1719, 0
          %v1804 = vsel %vm458, %v1720, 0
          %v1807 = vsel %vm458, %v1721, 0
          %v1810 = vsel %vm458, %v1722, 0
          %v1813 = vsel %vm458, %v1723, 0
          %v1816 = vsel %vm458, %v1724, 0
          %v1819 = vsel %vm458, %v1725, 0
          %v1822 = vsel %vm458, %v1726, 0
          %v1825 = vsel %vm555, %v1727, 0
          %1827 = vmatprep.subr.mxu0 0.0
          %1828 = vmatpush1.msra.mxu0 %v1825
          %1829 = vmatprep.subr.mxu0 0.0
          %1830 = vmatpush1.msra.mxu0 0.0
          %1831 = vmatprep.subr.mxu0 0.0
          %1832 = vmatpush1.msra.mxu0 0.0
          %1833 = vmatprep.subr.mxu0 0.0
          %1834 = vmatpush1.msra.mxu0 0.0
          %1835 = vmatprep.subr.mxu0 0.0
          %1836 = vmatpush1.msra.mxu0 0.0
          %1837 = vmatprep.subr.mxu0 0.0
          %1838 = vmatpush1.msra.mxu0 0.0
          %1839 = vmatprep.subr.mxu0 0.0
          %1840 = vmatpush1.msra.mxu0 0.0
          %1841 = vmatprep.subr.mxu0 0.0
          %1842 = vmatpush1.msra.mxu0 0.0
          %1843 = vmatprep.subr.mxu0 0.0
          %1844 = vmatpush1.msra.mxu0 0.0
          %1845 = vmatprep.subr.mxu0 0.0
          %1846 = vmatpush1.msra.mxu0 0.0
          %1847 = vmatprep.subr.mxu0 0.0
          %1848 = vmatpush1.msra.mxu0 0.0
          %1849 = vmatprep.subr.mxu0 0.0
          %1850 = vmatpush1.msra.mxu0 0.0
          %1851 = vmatprep.subr.mxu0 0.0
          %1852 = vmatpush1.msra.mxu0 0.0
          %1853 = vmatprep.subr.mxu0 0.0
          %1854 = vmatpush1.msra.mxu0 0.0
          %1855 = vmatprep.subr.mxu0 0.0
          %1856 = vmatpush1.msra.mxu0 0.0
          %1857 = vmatprep.subr.mxu0 0.0
          %1858 = vmatpush1.msra.mxu0 0.0
          %1859 = vmatprep.subr.mxu0 0.0
          %1860 = vmatpush1.msra.mxu0 0.0
          %1861 = vmatprep.subr.mxu0 0.0
          %1862 = vmatpush1.msra.mxu0 0.0
          %1863 = vmatprep.subr.mxu0 0.0
          %1864 = vmatpush1.msra.mxu0 0.0
          %1865 = vmatprep.subr.mxu0 0.0
          %1866 = vmatpush1.msra.mxu0 0.0
          %1867 = vmatprep.subr.mxu0 0.0
          %1868 = vmatpush1.msra.mxu0 0.0
          %1869 = vmatprep.subr.mxu0 0.0
          %1870 = vmatpush1.msra.mxu0 0.0
          %1871 = vmatprep.subr.mxu0 0.0
          %1872 = vmatpush1.msra.mxu0 0.0
          %1873 = vmatprep.subr.mxu0 0.0
          %1874 = vmatpush1.msra.mxu0 0.0
          %1875 = vmatprep.subr.mxu0 0.0
          %1876 = vmatpush1.msra.mxu0 0.0
          %1877 = vmatprep.subr.mxu0 0.0
          %1878 = vmatpush1.msra.mxu0 0.0
          %1879 = vmatprep.subr.mxu0 0.0
          %1880 = vmatpush1.msra.mxu0 0.0
          %1881 = vmatprep.subr.mxu0 0.0
          %1882 = vmatpush1.msra.mxu0 0.0
          %1883 = vmatprep.subr.mxu0 0.0
          %1884 = vmatpush1.msra.mxu0 0.0
          %1885 = vmatprep.subr.mxu0 0.0
          %1886 = vmatpush1.msra.mxu0 0.0
          %1887 = vmatprep.subr.mxu0 0.0
          %1888 = vmatpush1.msra.mxu0 0.0
          %1889 = vmatprep.subr.mxu0 0.0
          %1890 = vmatpush1.msra.mxu0 0.0
          %1891 = vmatprep.mubr.f32.mxu0 0.0
          %1892 = vmatmul.mubr.f32.gmra.mrb[0].mxu0 %v1729
          %v1893 = vpop.f32.mrb[0].mxu0
          %v1894 = vadd.f32 0.0, %v1893
          %v1895 = vpop.f32.mrb[0].mxu0
          %1896 = vmatprep.mubr.f32.mxu0 0.0
          %1897 = vmatmul.mubr.f32.gmra.mrb[0].mxu0 %v1732
          %v1898 = vpop.f32.mrb[0].mxu0
          %v1899 = vadd.f32 0.0, %v1898
          %v1900 = vpop.f32.mrb[0].mxu0
          %1901 = vmatprep.mubr.f32.mxu0 0.0
          %1902 = vmatmul.mubr.f32.gmra.mrb[0].mxu0 %v1735
          %v1903 = vpop.f32.mrb[0].mxu0
          %v1904 = vadd.f32 0.0, %v1903
          %v1905 = vpop.f32.mrb[0].mxu0
          %1906 = vmatprep.mubr.f32.mxu0 0.0
          %1907 = vmatmul.mubr.f32.gmra.mrb[0].mxu0 %v1738
          %v1908 = vpop.f32.mrb[0].mxu0
          %v1909 = vadd.f32 0.0, %v1908
          %v1910 = vpop.f32.mrb[0].mxu0
          %1911 = vmatprep.mubr.f32.mxu0 0.0
          %1912 = vmatmul.mubr.f32.gmra.mrb[0].mxu0 %v1741
          %v1913 = vpop.f32.mrb[0].mxu0
          %v1914 = vadd.f32 0.0, %v1913
          %v1915 = vpop.f32.mrb[0].mxu0
          %1916 = vmatprep.mubr.f32.mxu0 0.0
          %1917 = vmatmul.mubr.f32.gmra.mrb[0].mxu0 %v1744
          %v1918 = vpop.f32.mrb[0].mxu0
          %v1919 = vadd.f32 0.0, %v1918
          %v1920 = vpop.f32.mrb[0].mxu0
          %1921 = vmatprep.mubr.f32.mxu0 0.0
          %1922 = vmatmul.mubr.f32.gmra.mrb[0].mxu0 %v1747
          %v1923 = vpop.f32.mrb[0].mxu0
          %v1924 = vadd.f32 0.0, %v1923
          %v1925 = vpop.f32.mrb[0].mxu0
          %1926 = vmatprep.mubr.f32.mxu0 0.0
          %1927 = vmatmul.mubr.f32.gmra.mrb[0].mxu0 %v1750
          %v1928 = vpop.f32.mrb[0].mxu0
          %v1929 = vadd.f32 0.0, %v1928
          %v1930 = vpop.f32.mrb[0].mxu0
          %1931 = vmatprep.mubr.f32.mxu0 0.0
          %1932 = vmatmul.mubr.f32.gmra.mrb[0].mxu0 %v1753
          %v1933 = vpop.f32.mrb[0].mxu0
          %v1934 = vadd.f32 0.0, %v1933
          %v1935 = vpop.f32.mrb[0].mxu0
          %1936 = vmatprep.mubr.f32.mxu0 0.0
          %1937 = vmatmul.mubr.f32.gmra.mrb[0].mxu0 %v1756
          %v1938 = vpop.f32.mrb[0].mxu0
          %v1939 = vadd.f32 0.0, %v1938
          %v1940 = vpop.f32.mrb[0].mxu0
          %1941 = vmatprep.mubr.f32.mxu0 0.0
          %1942 = vmatmul.mubr.f32.gmra.mrb[0].mxu0 %v1759
          %v1943 = vpop.f32.mrb[0].mxu0
          %v1944 = vadd.f32 0.0, %v1943
          %v1945 = vpop.f32.mrb[0].mxu0
          %1946 = vmatprep.mubr.f32.mxu0 0.0
          %1947 = vmatmul.mubr.f32.gmra.mrb[0].mxu0 %v1762
          %v1948 = vpop.f32.mrb[0].mxu0
          %v1949 = vadd.f32 0.0, %v1948
          %v1950 = vpop.f32.mrb[0].mxu0
          %1951 = vmatprep.mubr.f32.mxu0 0.0
          %1952 = vmatmul.mubr.f32.gmra.mrb[0].mxu0 %v1765
          %v1953 = vpop.f32.mrb[0].mxu0
          %v1954 = vadd.f32 0.0, %v1953
          %v1955 = vpop.f32.mrb[0].mxu0
          %1956 = vmatprep.mubr.f32.mxu0 0.0
          %1957 = vmatmul.mubr.f32.gmra.mrb[0].mxu0 %v1768
          %v1958 = vpop.f32.mrb[0].mxu0
          %v1959 = vadd.f32 0.0, %v1958
          %v1960 = vpop.f32.mrb[0].mxu0
          %1961 = vmatprep.mubr.f32.mxu0 0.0
          %1962 = vmatmul.mubr.f32.gmra.mrb[0].mxu0 %v1771
          %v1963 = vpop.f32.mrb[0].mxu0
          %v1964 = vadd.f32 0.0, %v1963
          %v1965 = vpop.f32.mrb[0].mxu0
          %1966 = vmatprep.mubr.f32.mxu0 0.0
          %1967 = vmatmul.mubr.f32.gmra.mrb[0].mxu0 %v1774
          %v1968 = vpop.f32.mrb[0].mxu0
          %v1969 = vadd.f32 0.0, %v1968
          %v1970 = vpop.f32.mrb[0].mxu0
          %1971 = vmatprep.mubr.f32.mxu0 0.0
          %1972 = vmatmul.mubr.f32.gmra.mrb[0].mxu0 %v1777
          %v1973 = vpop.f32.mrb[0].mxu0
          %v1974 = vadd.f32 0.0, %v1973
          %v1975 = vpop.f32.mrb[0].mxu0
          %1976 = vmatprep.mubr.f32.mxu0 0.0
          %1977 = vmatmul.mubr.f32.gmra.mrb[0].mxu0 %v1780
          %v1978 = vpop.f32.mrb[0].mxu0
          %v1979 = vadd.f32 0.0, %v1978
          %v1980 = vpop.f32.mrb[0].mxu0
          %1981 = vmatprep.mubr.f32.mxu0 0.0
          %1982 = vmatmul.mubr.f32.gmra.mrb[0].mxu0 %v1783
          %v1983 = vpop.f32.mrb[0].mxu0
          %v1984 = vadd.f32 0.0, %v1983
          %v1985 = vpop.f32.mrb[0].mxu0
          %1986 = vmatprep.mubr.f32.mxu0 0.0
          %1987 = vmatmul.mubr.f32.gmra.mrb[0].mxu0 %v1786
          %v1988 = vpop.f32.mrb[0].mxu0
          %v1989 = vadd.f32 0.0, %v1988
          %v1990 = vpop.f32.mrb[0].mxu0
          %1991 = vmatprep.mubr.f32.mxu0 0.0
          %1992 = vmatmul.mubr.f32.gmra.mrb[0].mxu0 %v1789
          %v1993 = vpop.f32.mrb[0].mxu0
          %v1994 = vadd.f32 0.0, %v1993
          %v1995 = vpop.f32.mrb[0].mxu0
          %1996 = vmatprep.mubr.f32.mxu0 0.0
          %1997 = vmatmul.mubr.f32.gmra.mrb[0].mxu0 %v1792
          %v1998 = vpop.f32.mrb[0].mxu0
          %v1999 = vadd.f32 0.0, %v1998
          %v2000 = vpop.f32.mrb[0].mxu0
          %2001 = vmatprep.mubr.f32.mxu0 0.0
          %2002 = vmatmul.mubr.f32.gmra.mrb[0].mxu0 %v1795
          %v2003 = vpop.f32.mrb[0].mxu0
          %v2004 = vadd.f32 0.0, %v2003
          %v2005 = vpop.f32.mrb[0].mxu0
          %2006 = vmatprep.mubr.f32.mxu0 0.0
          %2007 = vmatmul.mubr.f32.gmra.mrb[0].mxu0 %v1798
          %v2008 = vpop.f32.mrb[0].mxu0
          %v2009 = vadd.f32 0.0, %v2008
          %v2010 = vpop.f32.mrb[0].mxu0
          %2011 = vmatprep.mubr.f32.mxu0 0.0
          %2012 = vmatmul.mubr.f32.gmra.mrb[0].mxu0 %v1801
          %v2013 = vpop.f32.mrb[0].mxu0
          %v2014 = vadd.f32 0.0, %v2013
          %v2015 = vpop.f32.mrb[0].mxu0
          %2016 = vmatprep.mubr.f32.mxu0 0.0
          %2017 = vmatmul.mubr.f32.gmra.mrb[0].mxu0 %v1804
          %v2018 = vpop.f32.mrb[0].mxu0
          %v2019 = vadd.f32 0.0, %v2018
          %v2020 = vpop.f32.mrb[0].mxu0
          %2021 = vmatprep.mubr.f32.mxu0 0.0
          %2022 = vmatmul.mubr.f32.gmra.mrb[0].mxu0 %v1807
          %v2023 = vpop.f32.mrb[0].mxu0
          %v2024 = vadd.f32 0.0, %v2023
          %v2025 = vpop.f32.mrb[0].mxu0
          %2026 = vmatprep.mubr.f32.mxu0 0.0
          %2027 = vmatmul.mubr.f32.gmra.mrb[0].mxu0 %v1810
          %v2028 = vpop.f32.mrb[0].mxu0
          %v2029 = vadd.f32 0.0, %v2028
          %v2030 = vpop.f32.mrb[0].mxu0
          %2031 = vmatprep.mubr.f32.mxu0 0.0
          %2032 = vmatmul.mubr.f32.gmra.mrb[0].mxu0 %v1813
          %v2033 = vpop.f32.mrb[0].mxu0
          %v2034 = vadd.f32 0.0, %v2033
          %v2035 = vpop.f32.mrb[0].mxu0
          %2036 = vmatprep.mubr.f32.mxu0 0.0
          %2037 = vmatmul.mubr.f32.gmra.mrb[0].mxu0 %v1816
          %v2038 = vpop.f32.mrb[0].mxu0
          %v2039 = vadd.f32 0.0, %v2038
          %v2040 = vpop.f32.mrb[0].mxu0
          %2041 = vmatprep.mubr.f32.mxu0 0.0
          %2042 = vmatmul.mubr.f32.gmra.mrb[0].mxu0 %v1819
          %v2043 = vpop.f32.mrb[0].mxu0
          %v2044 = vadd.f32 0.0, %v2043
          %v2045 = vpop.f32.mrb[0].mxu0
          %2046 = vmatprep.mubr.f32.mxu0 0.0
          %2047 = vmatmul.mubr.f32.gmra.mrb[0].mxu0 %v1822
          %v2048 = vpop.f32.mrb[0].mxu0
          %v2049 = vadd.f32 0.0, %v2048
          %v2050 = vpop.f32.mrb[0].mxu0
          %2051 = vdwg.mxu0
          %v2052 = vld [vmem:[#allocation4] sm:$0x1]
          %v2053 = vmul.f32 %v2052, 0.001953125
          %v2054 = vld [vmem:[#allocation5] sm:$0x1]
          %v2055 = vmul.f32 %v2054, 0.001953125
          %v2056 = vmul.f32 %v2053, %v2053
          %v2057 = vsub.f32 %v2055, %v2056
          %v2058 = vmax.f32 %v2057, 0.0
          %v2059 = vld [vmem:[#allocation15] sm:$0x1]
          %v2060 = vadd.f32 %v2058, 1e-05
          %v2061 = vrsqrt.pop %v2060
          %v2062 = vmul.f32 %v2059, %v2061
          %v2063 = vld [vmem:[#allocation15 + $0x1] sm:$0x1]
          %v2064 = vmul.f32 %v2053, %v2062
          %v2065 = vsub.f32 %v2063, %v2064
          %v2066 = vlaneseq
          %v2067 = vshrl.u32 %v2066, 7
          %v2068 = vsub.s32 0, %v2067
          %v2069 = vrot.slane %v2062, %v2068
          %v2070 = vmul.f32 %v1894, %v2069
          %v2071 = vmul.f32 %v1899, %v2069
          %v2072 = vmul.f32 %v1904, %v2069
          %v2073 = vmul.f32 %v1909, %v2069
          %v2074 = vmul.f32 %v1914, %v2069
          %v2075 = vmul.f32 %v1919, %v2069
          %v2076 = vmul.f32 %v1924, %v2069
          %v2077 = vmul.f32 %v1929, %v2069
          %v2078 = vmul.f32 %v1934, %v2069
          %v2079 = vmul.f32 %v1939, %v2069
          %v2080 = vmul.f32 %v1944, %v2069
          %v2081 = vmul.f32 %v1949, %v2069
          %v2082 = vmul.f32 %v1954, %v2069
          %v2083 = vmul.f32 %v1959, %v2069
          %v2084 = vmul.f32 %v1964, %v2069
          %v2085 = vmul.f32 %v1969, %v2069
          %v2086 = vmul.f32 %v1974, %v2069
          %v2087 = vmul.f32 %v1979, %v2069
          %v2088 = vmul.f32 %v1984, %v2069
          %v2089 = vmul.f32 %v1989, %v2069
          %v2090 = vmul.f32 %v1994, %v2069
          %v2091 = vmul.f32 %v1999, %v2069
          %v2092 = vmul.f32 %v2004, %v2069
          %v2093 = vmul.f32 %v2009, %v2069
          %v2094 = vmul.f32 %v2014, %v2069
          %v2095 = vmul.f32 %v2019, %v2069
          %v2096 = vmul.f32 %v2024, %v2069
          %v2097 = vmul.f32 %v2029, %v2069
          %v2098 = vmul.f32 %v2034, %v2069
          %v2099 = vmul.f32 %v2039, %v2069
          %v2100 = vmul.f32 %v2044, %v2069
          %v2101 = vmul.f32 %v2049, %v2069
          %v2102 = vlaneseq
          %v2103 = vshrl.u32 %v2102, 7
          %v2104 = vsub.s32 0, %v2103
          %v2105 = vrot.slane %v2065, %v2104
          %v2106 = vadd.f32 %v2070, %v2105
          %v2107 = vadd.f32 %v2071, %v2105
          %v2108 = vadd.f32 %v2072, %v2105
          %v2109 = vadd.f32 %v2073, %v2105
          %v2110 = vadd.f32 %v2074, %v2105
          %v2111 = vadd.f32 %v2075, %v2105
          %v2112 = vadd.f32 %v2076, %v2105
          %v2113 = vadd.f32 %v2077, %v2105
          %v2114 = vadd.f32 %v2078, %v2105
          %v2115 = vadd.f32 %v2079, %v2105
          %v2116 = vadd.f32 %v2080, %v2105
          %v2117 = vadd.f32 %v2081, %v2105
          %v2118 = vadd.f32 %v2082, %v2105
          %v2119 = vadd.f32 %v2083, %v2105
          %v2120 = vadd.f32 %v2084, %v2105
          %v2121 = vadd.f32 %v2085, %v2105
          %v2122 = vadd.f32 %v2086, %v2105
          %v2123 = vadd.f32 %v2087, %v2105
          %v2124 = vadd.f32 %v2088, %v2105
          %v2125 = vadd.f32 %v2089, %v2105
          %v2126 = vadd.f32 %v2090, %v2105
          %v2127 = vadd.f32 %v2091, %v2105
          %v2128 = vadd.f32 %v2092, %v2105
          %v2129 = vadd.f32 %v2093, %v2105
          %v2130 = vadd.f32 %v2094, %v2105
          %v2131 = vadd.f32 %v2095, %v2105
          %v2132 = vadd.f32 %v2096, %v2105
          %v2133 = vadd.f32 %v2097, %v2105
          %v2134 = vadd.f32 %v2098, %v2105
          %v2135 = vadd.f32 %v2099, %v2105
          %v2136 = vadd.f32 %v2100, %v2105
          %v2137 = vadd.f32 %v2101, %v2105
          %vm2138 = vcmask 7168
          %2139 = vst.msk [vmem:[%s416] sm:$0xff] %vm2138, %v2106
          %2140 = vst.msk [vmem:[%s416 + $0x8] sm:$0xff] %vm2138, %v2107
          %2141 = vst.msk [vmem:[%s416 + $0x10] sm:$0xff] %vm2138, %v2108
          %2142 = vst.msk [vmem:[%s416 + $0x18] sm:$0xff] %vm2138, %v2109
          %2143 = vst.msk [vmem:[%s416 + $0x20] sm:$0xff] %vm2138, %v2110
          %2144 = vst.msk [vmem:[%s416 + $0x28] sm:$0xff] %vm2138, %v2111
          %2145 = vst.msk [vmem:[%s416 + $0x30] sm:$0xff] %vm2138, %v2112
          %2146 = vst.msk [vmem:[%s416 + $0x38] sm:$0xff] %vm2138, %v2113
          %2147 = vst.msk [vmem:[%s416 + $0x40] sm:$0xff] %vm2138, %v2114
          %2148 = vst.msk [vmem:[%s416 + $0x48] sm:$0xff] %vm2138, %v2115
          %2149 = vst.msk [vmem:[%s416 + $0x50] sm:$0xff] %vm2138, %v2116
          %2150 = vst.msk [vmem:[%s416 + $0x58] sm:$0xff] %vm2138, %v2117
          %2151 = vst.msk [vmem:[%s416 + $0x60] sm:$0xff] %vm2138, %v2118
          %2152 = vst.msk [vmem:[%s416 + $0x68] sm:$0xff] %vm2138, %v2119
          %2153 = vst.msk [vmem:[%s416 + $0x70] sm:$0xff] %vm2138, %v2120
          %2154 = vst.msk [vmem:[%s416 + $0x78] sm:$0xff] %vm2138, %v2121
          %2155 = vst.msk [vmem:[%s416 + $0x80] sm:$0xff] %vm2138, %v2122
          %2156 = vst.msk [vmem:[%s416 + $0x88] sm:$0xff] %vm2138, %v2123
          %2157 = vst.msk [vmem:[%s416 + $0x90] sm:$0xff] %vm2138, %v2124
          %2158 = vst.msk [vmem:[%s416 + $0x98] sm:$0xff] %vm2138, %v2125
          %2159 = vst.msk [vmem:[%s416 + $0xa0] sm:$0xff] %vm2138, %v2126
          %2160 = vst.msk [vmem:[%s416 + $0xa8] sm:$0xff] %vm2138, %v2127
          %2161 = vst.msk [vmem:[%s416 + $0xb0] sm:$0xff] %vm2138, %v2128
          %2162 = vst.msk [vmem:[%s416 + $0xb8] sm:$0xff] %vm2138, %v2129
          %2163 = vst.msk [vmem:[%s416 + $0xc0] sm:$0xff] %vm2138, %v2130
          %2164 = vst.msk [vmem:[%s416 + $0xc8] sm:$0xff] %vm2138, %v2131
          %2165 = vst.msk [vmem:[%s416 + $0xd0] sm:$0xff] %vm2138, %v2132
          %2166 = vst.msk [vmem:[%s416 + $0xd8] sm:$0xff] %vm2138, %v2133
          %2167 = vst.msk [vmem:[%s416 + $0xe0] sm:$0xff] %vm2138, %v2134
          %2168 = vst.msk [vmem:[%s416 + $0xe8] sm:$0xff] %vm2138, %v2135
          %2169 = vst.msk [vmem:[%s416 + $0xf0] sm:$0xff] %vm2138, %v2136
          %2170 = vst.msk [vmem:[%s416 + $0xf8] sm:$0xff] %vm2138, %v2137
          %v2171 = vmax.f32 %v2106, 0.0
          %v2172 = vmax.f32 %v2107, 0.0
          %v2173 = vmax.f32 %v2108, 0.0
          %v2174 = vmax.f32 %v2109, 0.0
          %v2175 = vmax.f32 %v2110, 0.0
          %v2176 = vmax.f32 %v2111, 0.0
          %v2177 = vmax.f32 %v2112, 0.0
          %v2178 = vmax.f32 %v2113, 0.0
          %v2179 = vmax.f32 %v2114, 0.0
          %v2180 = vmax.f32 %v2115, 0.0
          %v2181 = vmax.f32 %v2116, 0.0
          %v2182 = vmax.f32 %v2117, 0.0
          %v2183 = vmax.f32 %v2118, 0.0
          %v2184 = vmax.f32 %v2119, 0.0
          %v2185 = vmax.f32 %v2120, 0.0
          %v2186 = vmax.f32 %v2121, 0.0
          %v2187 = vmax.f32 %v2122, 0.0
          %v2188 = vmax.f32 %v2123, 0.0
          %v2189 = vmax.f32 %v2124, 0.0
          %v2190 = vmax.f32 %v2125, 0.0
          %v2191 = vmax.f32 %v2126, 0.0
          %v2192 = vmax.f32 %v2127, 0.0
          %v2193 = vmax.f32 %v2128, 0.0
          %v2194 = vmax.f32 %v2129, 0.0
          %v2195 = vmax.f32 %v2130, 0.0
          %v2196 = vmax.f32 %v2131, 0.0
          %v2197 = vmax.f32 %v2132, 0.0
          %v2198 = vmax.f32 %v2133, 0.0
          %v2199 = vmax.f32 %v2134, 0.0
          %v2200 = vmax.f32 %v2135, 0.0
          %v2201 = vmax.f32 %v2136, 0.0
          %v2202 = vmax.f32 %v2137, 0.0
          %vm2203 = vcmask 72704
          %v2204 = vsel %vm2203, %v2171, 0.0
          %v2205 = vsel %vm2203, %v2172, 0.0
          %v2206 = vadd.f32 %v2204, %v2205
          %v2207 = vsel %vm2203, %v2173, 0.0
          %v2208 = vadd.f32 %v2206, %v2207
          %v2209 = vsel %vm2203, %v2174, 0.0
          %v2210 = vadd.f32 %v2208, %v2209
          %v2211 = vsel %vm2203, %v2175, 0.0
          %v2212 = vadd.f32 %v2210, %v2211
          %v2213 = vsel %vm2203, %v2176, 0.0
          %v2214 = vadd.f32 %v2212, %v2213
          %v2215 = vsel %vm2203, %v2177, 0.0
          %v2216 = vadd.f32 %v2214, %v2215
          %v2217 = vsel %vm2203, %v2178, 0.0
          %v2218 = vadd.f32 %v2216, %v2217
          %v2219 = vsel %vm2203, %v2179, 0.0
          %v2220 = vadd.f32 %v2218, %v2219
          %v2221 = vsel %vm2203, %v2180, 0.0
          %v2222 = vadd.f32 %v2220, %v2221
          %v2223 = vsel %vm2203, %v2181, 0.0
          %v2224 = vadd.f32 %v2222, %v2223
          %v2225 = vsel %vm2203, %v2182, 0.0
          %v2226 = vadd.f32 %v2224, %v2225
          %v2227 = vsel %vm2203, %v2183, 0.0
          %v2228 = vadd.f32 %v2226, %v2227
          %v2229 = vsel %vm2203, %v2184, 0.0
          %v2230 = vadd.f32 %v2228, %v2229
          %v2231 = vsel %vm2203, %v2185, 0.0
          %v2232 = vadd.f32 %v2230, %v2231
          %v2233 = vsel %vm2203, %v2186, 0.0
          %v2234 = vadd.f32 %v2232, %v2233
          %v2235 = vsel %vm2203, %v2187, 0.0
          %v2236 = vadd.f32 %v2234, %v2235
          %v2237 = vsel %vm2203, %v2188, 0.0
          %v2238 = vadd.f32 %v2236, %v2237
          %v2239 = vsel %vm2203, %v2189, 0.0
          %v2240 = vadd.f32 %v2238, %v2239
          %v2241 = vsel %vm2203, %v2190, 0.0
          %v2242 = vadd.f32 %v2240, %v2241
          %v2243 = vsel %vm2203, %v2191, 0.0
          %v2244 = vadd.f32 %v2242, %v2243
          %v2245 = vsel %vm2203, %v2192, 0.0
          %v2246 = vadd.f32 %v2244, %v2245
          %v2247 = vsel %vm2203, %v2193, 0.0
          %v2248 = vadd.f32 %v2246, %v2247
          %v2249 = vsel %vm2203, %v2194, 0.0
          %v2250 = vadd.f32 %v2248, %v2249
          %v2251 = vsel %vm2203, %v2195, 0.0
          %v2252 = vadd.f32 %v2250, %v2251
          %v2253 = vsel %vm2203, %v2196, 0.0
          %v2254 = vadd.f32 %v2252, %v2253
          %v2255 = vsel %vm2203, %v2197, 0.0
          %v2256 = vadd.f32 %v2254, %v2255
          %v2257 = vsel %vm2203, %v2198, 0.0
          %v2258 = vadd.f32 %v2256, %v2257
          %v2259 = vsel %vm2203, %v2199, 0.0
          %v2260 = vadd.f32 %v2258, %v2259
          %v2261 = vsel %vm2203, %v2200, 0.0
          %v2262 = vadd.f32 %v2260, %v2261
          %v2263 = vsel %vm2203, %v2201, 0.0
          %v2264 = vadd.f32 %v2262, %v2263
          %v2265 = vsel %vm2203, %v2202, 0.0
          %v2266 = vadd.f32 %v2264, %v2265
          %v2267 = vrot.slane %v2266, 4
          %v2268 = vadd.f32 %v2266, %v2267
          %v2269 = vrot.slane %v2268, 2
          %v2270 = vadd.f32 %v2268, %v2269
          %v2271 = vrot.slane %v2270, 1
          %v2272 = vadd.f32 %v2270, %v2271
          %v2273 = vmul.f32 %v2272, 0.00390625
          %v2274 = vld [vmem:[#allocation12] sm:$0xff]
          %v2275 = vld [vmem:[#allocation12 + $0x8] sm:$0x1]
          %v2276 = vld [vmem:[#allocation17] sm:$0x1]
          %v2278 = vsel %vm2203, %v2273, 0
          %vm2280 = vcmask 1040384
          %v2282 = vsel %vm2280, %v2275, 0
          %2284 = vmatprep.subr.mxu0 0.0
          %2285 = vmatpush1.msra.mxu0 %v2274
          %2286 = vmatprep.subr.mxu0 0.0
          %2287 = vmatpush1.msra.mxu0 %v2282
          %2288 = vmatprep.subr.mxu0 0.0
          %2289 = vmatpush1.msra.mxu0 0.0
          %2290 = vmatprep.subr.mxu0 0.0
          %2291 = vmatpush1.msra.mxu0 0.0
          %2292 = vmatprep.subr.mxu0 0.0
          %2293 = vmatpush1.msra.mxu0 0.0
          %2294 = vmatprep.subr.mxu0 0.0
          %2295 = vmatpush1.msra.mxu0 0.0
          %2296 = vmatprep.subr.mxu0 0.0
          %2297 = vmatpush1.msra.mxu0 0.0
          %2298 = vmatprep.subr.mxu0 0.0
          %2299 = vmatpush1.msra.mxu0 0.0
          %2300 = vmatprep.subr.mxu0 0.0
          %2301 = vmatpush1.msra.mxu0 0.0
          %2302 = vmatprep.subr.mxu0 0.0
          %2303 = vmatpush1.msra.mxu0 0.0
          %2304 = vmatprep.subr.mxu0 0.0
          %2305 = vmatpush1.msra.mxu0 0.0
          %2306 = vmatprep.subr.mxu0 0.0
          %2307 = vmatpush1.msra.mxu0 0.0
          %2308 = vmatprep.subr.mxu0 0.0
          %2309 = vmatpush1.msra.mxu0 0.0
          %2310 = vmatprep.subr.mxu0 0.0
          %2311 = vmatpush1.msra.mxu0 0.0
          %2312 = vmatprep.subr.mxu0 0.0
          %2313 = vmatpush1.msra.mxu0 0.0
          %2314 = vmatprep.subr.mxu0 0.0
          %2315 = vmatpush1.msra.mxu0 0.0
          %2316 = vmatprep.subr.mxu0 0.0
          %2317 = vmatpush1.msra.mxu0 0.0
          %2318 = vmatprep.subr.mxu0 0.0
          %2319 = vmatpush1.msra.mxu0 0.0
          %2320 = vmatprep.subr.mxu0 0.0
          %2321 = vmatpush1.msra.mxu0 0.0
          %2322 = vmatprep.subr.mxu0 0.0
          %2323 = vmatpush1.msra.mxu0 0.0
          %2324 = vmatprep.subr.mxu0 0.0
          %2325 = vmatpush1.msra.mxu0 0.0
          %2326 = vmatprep.subr.mxu0 0.0
          %2327 = vmatpush1.msra.mxu0 0.0
          %2328 = vmatprep.subr.mxu0 0.0
          %2329 = vmatpush1.msra.mxu0 0.0
          %2330 = vmatprep.subr.mxu0 0.0
          %2331 = vmatpush1.msra.mxu0 0.0
          %2332 = vmatprep.subr.mxu0 0.0
          %2333 = vmatpush1.msra.mxu0 0.0
          %2334 = vmatprep.subr.mxu0 0.0
          %2335 = vmatpush1.msra.mxu0 0.0
          %2336 = vmatprep.subr.mxu0 0.0
          %2337 = vmatpush1.msra.mxu0 0.0
          %2338 = vmatprep.subr.mxu0 0.0
          %2339 = vmatpush1.msra.mxu0 0.0
          %2340 = vmatprep.subr.mxu0 0.0
          %2341 = vmatpush1.msra.mxu0 0.0
          %2342 = vmatprep.subr.mxu0 0.0
          %2343 = vmatpush1.msra.mxu0 0.0
          %2344 = vmatprep.subr.mxu0 0.0
          %2345 = vmatpush1.msra.mxu0 0.0
          %2346 = vmatprep.subr.mxu0 0.0
          %2347 = vmatpush1.msra.mxu0 0.0
          %2348 = vmatprep.mubr.f32.mxu0 0.0
          %2349 = vmatmul.mubr.f32.gmra.mrb[0].mxu0 %v2278
          %v2350 = vpop.f32.mrb[0].mxu0
          %v2351 = vadd.f32 %v2276, %v2350
          %v2352 = vpop.f32.mrb[0].mxu0
          %2353 = vdwg.mxu0
          %vm2354 = vcmask 57344
          %v2355 = vsel %vm2354, %v2351, -inf
          %2356 = vmax.xlane.f32.xlu0 %v2355
          %v2357 = vpop.xlane.xlu0 %2356
          %v2358 = vsub.f32 %v2351, %v2357
          %v2359 = vmul.f32 %v2358, 1.442695
          %v2360 = vpow.pop %v2359
          %v2361 = vsel %vm2354, %v2360, 0.0
          %2362 = vadd.xlane.f32.xlu0 %v2361
          %v2363 = vpop.xlane.xlu0 %2362
          %v2364 = vrcp.pop %v2363
          %v2365 = vmul.f32 %v2360, %v2364
          %2366 = vst.msk [vmem:[%s422] sm:$0x1] %vm2354, %v2365
        $region96: #{tpu_custom_call.1} parent=47 // pred_fallthru
          _
        %s2367 = sand.u32 %s204, 1
        %s2368 = scalar_lea.sflag [#allocation8], %s2367
        %s2369 = sand.u32 %s204, 1
        %s2370 = smul.addr %s2369, 256
        %s2371 = scalar_lea.vmem [#allocation18], %s2370
        %s2372 = sand.u32 %s230, 1
        %s2373 = scalar_lea.sflag [#allocation20], %s2372
        %s2374 = sand.u32 %s230, 1
        %s2375 = scalar_lea.vmem [#allocation19], %s2374
        // Predicated region
        $region97: #{tpu_custom_call.1} parent=47 // pred_check
          %p2376 = pneg %p214
        $region98: #{tpu_custom_call.1} parent=47 // pred_check_branch
          %2378 = sbr.rel (%p2376) target = $region100
        $region99: #{tpu_custom_call.1} parent=47 // pred_region
          %s2379 = smul.u32 32, %s37
          %s2381 = ssub.s32 4096, 4096
          %2382 = vsyncadd %s2368, %s2381
          %s2383 = smul.addr %s2379, 128
          %s2384 = scalar_lea.hbm %s7, %s2383
          %s2385 = sshll.u32 %s2371, 4
          %s2386 = int_to_ptr.vmem [resolvable:$true] %s2385
          %2391 = dma.vmem_to_hbm [thread:$0]  %s2386, 4096, %s2384, %s2368, 128, 128, 8
        $region100: #{tpu_custom_call.1} parent=47 // pred_fallthru
          _
        // Predicated region
        $region101: #{tpu_custom_call.1} parent=47 // pred_check
          %p2392 = pneg %p240
        $region102: #{tpu_custom_call.1} parent=47 // pred_check_branch
          %2394 = sbr.rel (%p2392) target = $region104
        $region103: #{tpu_custom_call.1} parent=47 // pred_region
          %s2396 = ssub.s32 16, 16
          %2397 = vsyncadd %s2373, %s2396
          %s2398 = smul.addr %s37, 16
          %s2399 = scalar_lea.hbm %s8, %s2398
          %s2401 = sshll.u32 %s2375, 4
          %s2402 = int_to_ptr.vmem [resolvable:$true] %s2401
          %2404 = dma.vmem_to_hbm [thread:$0]  %s2402, 16, %s2399, %s2373
        $region104: #{tpu_custom_call.1} parent=47 // pred_fallthru
          _
      $region48: #{tpu_custom_call.1} parent=5 // pred_fallthru
        _
      %p2405 = scmp.le.s32.totalorder 2, %s27
      // Predicated region
      $region105: #{tpu_custom_call.1} parent=5 // pred_check
        %p2406 = pneg %p2405
      $region106: #{tpu_custom_call.1} parent=5 // pred_check_branch
        %2408 = sbr.rel (%p2406) target = $region108
      $region107: #{tpu_custom_call.1} parent=5 // pred_region
        %s2409 = ssub.s32 %s27, 2
        // Predicated region
        $region109: #{tpu_custom_call.1} parent=107 // pred_check
          %p2410 = pneg %p220
        $region110: #{tpu_custom_call.1} parent=107 // pred_check_branch
          %2412 = sbr.rel (%p2410) target = $region112
        $region111: #{tpu_custom_call.1} parent=107 // pred_region
          %s2413 = sand.u32 %s205, 1
          %s2414 = scalar_lea.sflag [#allocation8], %s2413
          %s2415 = sand.u32 %s205, 1
          %s2416 = smul.addr %s2415, 256
          %s2417 = scalar_lea.vmem [#allocation18], %s2416
          %2418 = dma.done %s2414, 4096
        $region112: #{tpu_custom_call.1} parent=107 // pred_fallthru
          _
        // Predicated region
        $region113: #{tpu_custom_call.1} parent=107 // pred_check
          %p2419 = pneg %p246
        $region114: #{tpu_custom_call.1} parent=107 // pred_check_branch
          %2421 = sbr.rel (%p2419) target = $region116
        $region115: #{tpu_custom_call.1} parent=107 // pred_region
          %s2422 = sand.u32 %s231, 1
          %s2423 = scalar_lea.sflag [#allocation20], %s2422
          %s2424 = sand.u32 %s231, 1
          %s2425 = scalar_lea.vmem [#allocation19], %s2424
          %2426 = dma.done %s2423, 16
        $region116: #{tpu_custom_call.1} parent=107 // pred_fallthru
          _
      $region108: #{tpu_custom_call.1} parent=5 // pred_fallthru
        _
    $region6: #{tpu_custom_call.1} parent=1 // loop_footer
      %s31 = sadd.s32 1, %s27
    $region7: #{tpu_custom_call.1} parent=1 // loop_footer_branch
      %26 = sbr.rel target = $region3
    $region8: #{tpu_custom_call.1} parent=1 // loop_exit
      _
    %2427 = vsyncpa [#allocation7], 1
    %s2428 = scalar_lea.sflag [#allocation7], 1
    %2429 = vsyncpa %s2428, 1
    %2430 = vsyncpa [#allocation10], 1
    %2431 = vsyncpa [#allocation13], 1
    %2432 = vsyncpa [#allocation16], 1
    %2433 = vsyncpa [#allocation8], 1
    %s2434 = scalar_lea.sflag [#allocation8], 1
    %2435 = vsyncpa %s2434, 1
    %2436 = vsyncpa [#allocation20], 1
    %s2437 = scalar_lea.sflag [#allocation20], 1
    %2438 = vsyncpa %s2437, 1

</llo_original>
